<compile_context>
chip_gen: v7x
topology: tpu7x:2x2x1
jax: 0.10.0
libtpu: 0.0.40
codegen_flags: <defaults>
</compile_context>

<pallas_src>
import functools

import jax
import jax.numpy as jnp
from jax import lax
from jax.experimental import pallas as pl
from jax.experimental.pallas import tpu as pltpu

_EPS_COS = 1e-8
_EPS_VAR = 1e-4


def _vmem_capacity_bytes():
    """Best-effort query of per-core VMEM; conservative (v7x) fallback."""
    try:
        info = pltpu.get_tpu_info()
        cap = getattr(info, "vmem_capacity_bytes", None)
        if cap:
            return int(cap)
    except Exception:
        pass
    return 64 * 1024 * 1024


def _plan_tiles(n_total, dim, itemsize, tile_n=None):
    """VMEM/D-aware tile picker + explicit scoped-VMEM budget."""
    gram_bytes = 3 * dim * dim * 4                       # Σxᵀx scratch
    vec_bytes = 2 * 3 * dim * 4 + 2 * dim * dim * 4 + 8  # m1/m2 scratch + finalize temps

    def residency(tn):
        inputs = 3 * 2 * tn * dim * itemsize             # double-buffered input blocks
        temps = 8 * tn * dim * 4                         # f32 copies / squares / diffs
        return inputs + temps + gram_bytes + vec_bytes

    cap = _vmem_capacity_bytes()
    if tile_n is None:
        target_block = 2 << 20                           # ~2 MiB per input block
        tn = (target_block // max(1, dim * itemsize)) // 8 * 8
        tn = max(8, min(512, tn))
        tn = min(tn, -(-n_total // 8) * 8)               # don't exceed (padded) batch
        while tn > 8 and residency(tn) > int(0.7 * cap):
            tn = max(8, ((tn // 2) // 8) * 8)
    else:
        assert tile_n % 8 == 0 and tile_n >= 8, "tile_n must be a positive multiple of 8"
        tn = tile_n

    vmem_limit = int(min(min(cap, 128 << 20),
                         max(32 << 20, residency(tn) * 5 // 4)))
    return tn, vmem_limit


def _make_kernel(n_total, tile_n, dim, pad_rows, gram_dtype):
    inv_n = 1.0 / n_total            # compile-time constants (no in-kernel divides)
    inv_nm1 = 1.0 / (n_total - 1)
    n_f = float(n_total)

    def kernel(a_ref, p_ref, n_ref, o_ref, m1_ref, m2_ref, g2_ref, t_ref):
        i = pl.program_id(0)

        @pl.when(i == 0)
        def _init():
            m1_ref[...] = jnp.zeros_like(m1_ref)
            m2_ref[...] = jnp.zeros_like(m2_ref)
            g2_ref[...] = jnp.zeros_like(g2_ref)
            t_ref[...] = jnp.zeros_like(t_ref)

        # f32 copies for VPU/EUP math (v5e has no bf16 VPU/EUP); the MXU grams
        # below use the original-dtype tiles.
        af = a_ref[...].astype(jnp.float32)
        pf = p_ref[...].astype(jnp.float32)
        nf = n_ref[...].astype(jnp.float32)

        if pad_rows:
            row = lax.broadcasted_iota(jnp.int32, (tile_n, 1), 0) + i * tile_n
            mask = (row < n_total).astype(jnp.float32)    # (TN, 1)
            af = af * mask
            pf = pf * mask
            nf = nf * mask

        # Squares computed once; reused for row dots AND the streamed Σx².
        sq_a = af * af
        sq_p = pf * pf
        sq_n = nf * nf

        aa = jnp.sum(sq_a, axis=-1, keepdims=True)        # (TN, 1)
        pp = jnp.sum(sq_p, axis=-1, keepdims=True)
        nn = jnp.sum(sq_n, axis=-1, keepdims=True)
        ap = jnp.sum(af * pf, axis=-1, keepdims=True)
        an = jnp.sum(af * nf, axis=-1, keepdims=True)

        # Direct-form distances (no cancellation when anchor ≈ positive).
        dap = af - pf
        dan = af - nf
        d_ap = jnp.sqrt(jnp.sum(dap * dap, axis=-1, keepdims=True))
        d_an = jnp.sqrt(jnp.sum(dan * dan, axis=-1, keepdims=True))

        a_nrm = jnp.sqrt(aa)
        p_nrm = jnp.sqrt(pp)
        n_nrm = jnp.sqrt(nn)
        s_ap = ap * pl.reciprocal(a_nrm * p_nrm + _EPS_COS, approx=True)
        s_an = an * pl.reciprocal(a_nrm * n_nrm + _EPS_COS, approx=True)
        margin = 1.0 + 2.0 * jax.nn.sigmoid(s_an - s_ap)
        hinge = jnp.maximum(d_ap - d_an + margin, 0.0)
        if pad_rows:
            hinge = hinge * mask
        t_ref[...] += jnp.sum(hinge, keepdims=True)        # (1, 1)

        # -------- streamed first/second moments + grams per group (a, p, n)
        groups = ((a_ref, af, sq_a), (p_ref, pf, sq_p), (n_ref, nf, sq_n))
        for g, (x_ref, xf, sq_x) in enumerate(groups):
            m1_ref[g] += jnp.sum(xf, axis=0, keepdims=True)     # Σx    (1, D)
            m2_ref[g] += jnp.sum(sq_x, axis=0, keepdims=True)   # Σx²   (1, D)
            # Gram with original-dtype operands (bf16 stays bf16), f32 accumulate.
            xg = xf.astype(gram_dtype) if pad_rows else x_ref[...]
            g2_ref[g] += lax.dot_general(                        # Σ xᵀx (D, D)
                xg, xg, (((0,), (0,)), ((), ())),
                preferred_element_type=jnp.float32)

        # -------- finalize on the last batch tile
        @pl.when(i == pl.num_programs(0) - 1)
        def _finalize():
            var_hinge = 0.0
            cov_fro = 0.0
            diag_sq = 0.0
            for g in range(3):
                mu = m1_ref[g] * inv_n                               # (1, D)
                var = (m2_ref[g] - n_f * mu * mu) * inv_nm1          # diag(cov)
                std = jnp.sqrt(jnp.maximum(var, 0.0) + _EPS_VAR)
                var_hinge += jnp.sum(jnp.maximum(1.0 - std, 0.0))
                diag_sq += jnp.sum(var * var)

                # ||cov||_F² without materializing μμᵀ / cov:
                #   (||G||_F² − 2N·μᵀGμ + N²·(||μ||²)²) / (N−1)²
                G = g2_ref[g]                                        # (D, D)
                g_fro = jnp.sum(G * G)
                mu_g = lax.dot_general(mu, G, (((1,), (0,)), ((), ())),
                                       preferred_element_type=jnp.float32)  # (1, D)
                mu_g_mu = jnp.sum(mu_g * mu)
                mu_sq = jnp.sum(mu * mu)
                cov_fro += (g_fro - 2.0 * n_f * mu_g_mu
                            + (n_f * n_f) * mu_sq * mu_sq) * (inv_nm1 * inv_nm1)

            var_loss = var_hinge * (1.0 / (3.0 * dim))
            cov_loss = (cov_fro - diag_sq) * (1.0 / (3.0 * dim))   # off-diag only
            triplet = t_ref[...] * inv_n                            # (1, 1)
            o_ref[...] = 20.0 * triplet + 5.0 * cov_loss + 1.0 * var_loss

    return kernel


@functools.partial(jax.jit, static_argnames=("tile_n",))
def m2fnet_audio_embedding_loss(anchor, positive, negative, *, tile_n=None):
    assert anchor.shape == positive.shape == negative.shape
    n_total, dim = anchor.shape
    assert n_total >= 2, "need at least 2 samples for the (N-1) normalization"
    itemsize = jnp.dtype(anchor.dtype).itemsize

    tile_n, vmem_limit = _plan_tiles(n_total, dim, itemsize, tile_n)

    # Pad the batch to a tile multiple; padded rows are masked out in-kernel.
    n_padded = -(-n_total // tile_n) * tile_n
    if n_padded != n_total:
        pad = ((0, n_padded - n_total), (0, 0))
        anchor = jnp.pad(anchor, pad)
        positive = jnp.pad(positive, pad)
        negative = jnp.pad(negative, pad)
    num_tiles = n_padded // tile_n

    kernel = _make_kernel(n_total, tile_n, dim, n_padded - n_total, anchor.dtype)
    grid_spec = pltpu.PrefetchScalarGridSpec(
        num_scalar_prefetch=0,
        grid=(num_tiles,),
        in_specs=[pl.BlockSpec((tile_n, dim), lambda i: (i, 0))] * 3,
        out_specs=pl.BlockSpec((1, 1), lambda i: (0, 0)),
        scratch_shapes=[
            pltpu.VMEM((3, 1, dim), jnp.float32),     # Σx   per group
            pltpu.VMEM((3, 1, dim), jnp.float32),     # Σx²  per group
            pltpu.VMEM((3, dim, dim), jnp.float32),   # Σxᵀx per group
            pltpu.VMEM((1, 1), jnp.float32),          # Σ triplet hinge
        ],
    )
    out = pl.pallas_call(
        kernel,
        out_shape=jax.ShapeDtypeStruct((1, 1), jnp.float32),
        grid_spec=grid_spec,
        compiler_params=pltpu.CompilerParams(
            dimension_semantics=("arbitrary",),       # batch-tile axis is a reduction
            vmem_limit_bytes=vmem_limit),
    )(anchor, positive, negative)
    return out[0, 0]


def _reference_loss(a, p, n):
    """Pure-JAX reference implementing the same formulation (centered form)."""
    N, D = a.shape
    d_ap = jnp.linalg.norm(a - p, axis=-1)
    d_an = jnp.linalg.norm(a - n, axis=-1)
    cos = lambda x, y: jnp.sum(x * y, -1) / (
        jnp.linalg.norm(x, axis=-1) * jnp.linalg.norm(y, axis=-1) + _EPS_COS)
    margin = 1.0 + 2.0 * jax.nn.sigmoid(cos(a, n) - cos(a, p))
    triplet = jnp.mean(jnp.maximum(d_ap - d_an + margin, 0.0))

    def var_cov(x):
        xc = x - x.mean(0, keepdims=True)
        var = jnp.sum(xc * xc, 0) / (N - 1)
        v = jnp.mean(jnp.maximum(1.0 - jnp.sqrt(var + _EPS_VAR), 0.0))
        cov = (xc.T @ xc) / (N - 1)
        c = jnp.sum((cov * (1.0 - jnp.eye(D))) ** 2) / D
        return v, c

    vs, cs = zip(*(var_cov(x) for x in (a, p, n)))
    return 20.0 * triplet + 5.0 * (sum(cs) / 3.0) + 1.0 * (sum(vs) / 3.0)


if __name__ == "__main__":
    key = jax.random.PRNGKey(0)
    ka, kp, kn = jax.random.split(key, 3)
    N, D = 16, 32
    anchor = jax.random.normal(ka, (N, D), jnp.float32)
    positive = anchor + 0.1 * jax.random.normal(kp, (N, D), jnp.float32)
    # negative close enough to the anchor that the triplet hinge is active.
    negative = anchor + 0.3 * jax.random.normal(kn, (N, D), jnp.float32)

    ref = _reference_loss(anchor, positive, negative)

    # 1) streaming path: tile_n=8 -> 2 grid steps (exercises accumulation/finalize).
    loss = m2fnet_audio_embedding_loss(anchor, positive, negative, tile_n=8)
    jax.block_until_ready(loss)
    assert jnp.allclose(loss, ref, rtol=2e-3, atol=1e-3), (float(loss), float(ref))

    # 2) default VMEM/D-aware tile picker path.
    loss2 = m2fnet_audio_embedding_loss(anchor, positive, negative)
    jax.block_until_ready(loss2)
    assert jnp.allclose(loss2, ref, rtol=2e-3, atol=1e-3), (float(loss2), float(ref))

    # 3) non-multiple-of-8 batch -> zero-padded + row-masked streaming path.
    N2 = 13
    a2, p2, n2 = anchor[:N2], positive[:N2], negative[:N2]
    ref3 = _reference_loss(a2, p2, n2)
    loss3 = m2fnet_audio_embedding_loss(a2, p2, n2, tile_n=8)
    jax.block_until_ready(loss3)
    assert jnp.allclose(loss3, ref3, rtol=2e-3, atol=1e-3), (float(loss3), float(ref3))

    print("KERNEL_OK")
</pallas_src>

<mosaic_0001>
module attributes {stable_mosaic.version = 11 : i64} {
  func.func @kernel(%arg0: i32, %arg1: memref<8x32xf32, #tpu.memory_space<vmem>>, %arg2: memref<8x32xf32, #tpu.memory_space<vmem>>, %arg3: memref<8x32xf32, #tpu.memory_space<vmem>>, %arg4: memref<1x1xf32, #tpu.memory_space<vmem>>, %arg5: memref<3x1x32xf32, #tpu.memory_space<vmem>>, %arg6: memref<3x1x32xf32, #tpu.memory_space<vmem>>, %arg7: memref<3x32x32xf32, #tpu.memory_space<vmem>>, %arg8: memref<1x1xf32, #tpu.memory_space<vmem>>) attributes {dimension_semantics = [#tpu.dimension_semantics<arbitrary>], iteration_bounds = array<i64: 2>, scalar_prefetch = 0 : i64, scratch_operands = 4 : i64, tpu.core_type = #tpu.core_type<tc>, window_params = [{transform_indices = @transform_0, window_bounds = array<i64: 8, 32>}, {transform_indices = @transform_1, window_bounds = array<i64: 8, 32>}, {transform_indices = @transform_2, window_bounds = array<i64: 8, 32>}, {pipeline_mode = #tpu.pipeline_mode<synchronous>, transform_indices = @transform_3, window_bounds = array<i64: 1, 1>}]} {
    %c0_i32 = arith.constant 0 : i32
    %0 = arith.cmpi eq, %arg0, %c0_i32 : i32
    %1 = arith.extui %0 : i1 to i32
    %c0_i32_0 = arith.constant 0 : i32
    %2 = arith.cmpi ne, %1, %c0_i32_0 : i32
    scf.if %2 {
      %cst_91 = arith.constant 0.000000e+00 : f32
      %141 = vector.broadcast %cst_91 : f32 to vector<3x1x32xf32>
      %c0_92 = arith.constant 0 : index
      %c0_93 = arith.constant 0 : index
      %c0_94 = arith.constant 0 : index
      %142 = vector.load %arg5[%c0_92, %c0_93, %c0_94] : memref<3x1x32xf32, #tpu.memory_space<vmem>>, vector<3x1x32xf32>
      tpu.vector_store %arg5[%c0_92, %c0_93, %c0_94], %141 {strides = array<i32>} : memref<3x1x32xf32, #tpu.memory_space<vmem>>, vector<3x1x32xf32>,
      %cst_95 = arith.constant 0.000000e+00 : f32
      %143 = vector.broadcast %cst_95 : f32 to vector<3x1x32xf32>
      %c0_96 = arith.constant 0 : index
      %c0_97 = arith.constant 0 : index
      %c0_98 = arith.constant 0 : index
      %144 = vector.load %arg6[%c0_96, %c0_97, %c0_98] : memref<3x1x32xf32, #tpu.memory_space<vmem>>, vector<3x1x32xf32>
      tpu.vector_store %arg6[%c0_96, %c0_97, %c0_98], %143 {strides = array<i32>} : memref<3x1x32xf32, #tpu.memory_space<vmem>>, vector<3x1x32xf32>,
      %cst_99 = arith.constant 0.000000e+00 : f32
      %145 = vector.broadcast %cst_99 : f32 to vector<3x32x32xf32>
      %c0_100 = arith.constant 0 : index
      %c0_101 = arith.constant 0 : index
      %c0_102 = arith.constant 0 : index
      %146 = vector.load %arg7[%c0_100, %c0_101, %c0_102] : memref<3x32x32xf32, #tpu.memory_space<vmem>>, vector<3x32x32xf32>
      tpu.vector_store %arg7[%c0_100, %c0_101, %c0_102], %145 {strides = array<i32>} : memref<3x32x32xf32, #tpu.memory_space<vmem>>, vector<3x32x32xf32>,
      %cst_103 = arith.constant 0.000000e+00 : f32
      %147 = vector.broadcast %cst_103 : f32 to vector<1x1xf32>
      %c0_104 = arith.constant 0 : index
      %c0_105 = arith.constant 0 : index
      %148 = vector.load %arg8[%c0_104, %c0_105] : memref<1x1xf32, #tpu.memory_space<vmem>>, vector<1x1xf32>
      tpu.vector_store %arg8[%c0_104, %c0_105], %147 {strides = array<i32>} : memref<1x1xf32, #tpu.memory_space<vmem>>, vector<1x1xf32>,
    } else {
    }
    %c0 = arith.constant 0 : index
    %c0_1 = arith.constant 0 : index
    %3 = vector.load %arg1[%c0, %c0_1] : memref<8x32xf32, #tpu.memory_space<vmem>>, vector<8x32xf32>
    %c0_2 = arith.constant 0 : index
    %c0_3 = arith.constant 0 : index
    %4 = vector.load %arg2[%c0_2, %c0_3] : memref<8x32xf32, #tpu.memory_space<vmem>>, vector<8x32xf32>
    %c0_4 = arith.constant 0 : index
    %c0_5 = arith.constant 0 : index
    %5 = vector.load %arg3[%c0_4, %c0_5] : memref<8x32xf32, #tpu.memory_space<vmem>>, vector<8x32xf32>
    %6 = arith.mulf %3, %3 : vector<8x32xf32>
    %7 = arith.mulf %4, %4 : vector<8x32xf32>
    %8 = arith.mulf %5, %5 : vector<8x32xf32>
    %cst = arith.constant dense<0.000000e+00> : vector<8xf32>
    %9 = vector.multi_reduction <add>, %6, %cst [1] : vector<8x32xf32> to vector<8xf32>
    %10 = vector.shape_cast %9 : vector<8xf32> to vector<8x1xf32>
    %cst_6 = arith.constant dense<0.000000e+00> : vector<8xf32>
    %11 = vector.multi_reduction <add>, %7, %cst_6 [1] : vector<8x32xf32> to vector<8xf32>
    %12 = vector.shape_cast %11 : vector<8xf32> to vector<8x1xf32>
    %cst_7 = arith.constant dense<0.000000e+00> : vector<8xf32>
    %13 = vector.multi_reduction <add>, %8, %cst_7 [1] : vector<8x32xf32> to vector<8xf32>
    %14 = vector.shape_cast %13 : vector<8xf32> to vector<8x1xf32>
    %15 = arith.mulf %3, %4 : vector<8x32xf32>
    %cst_8 = arith.constant dense<0.000000e+00> : vector<8xf32>
    %16 = vector.multi_reduction <add>, %15, %cst_8 [1] : vector<8x32xf32> to vector<8xf32>
    %17 = vector.shape_cast %16 : vector<8xf32> to vector<8x1xf32>
    %18 = arith.mulf %3, %5 : vector<8x32xf32>
    %cst_9 = arith.constant dense<0.000000e+00> : vector<8xf32>
    %19 = vector.multi_reduction <add>, %18, %cst_9 [1] : vector<8x32xf32> to vector<8xf32>
    %20 = vector.shape_cast %19 : vector<8xf32> to vector<8x1xf32>
    %21 = arith.subf %3, %4 : vector<8x32xf32>
    %22 = arith.subf %3, %5 : vector<8x32xf32>
    %23 = arith.mulf %21, %21 : vector<8x32xf32>
    %cst_10 = arith.constant dense<0.000000e+00> : vector<8xf32>
    %24 = vector.multi_reduction <add>, %23, %cst_10 [1] : vector<8x32xf32> to vector<8xf32>
    %25 = vector.shape_cast %24 : vector<8xf32> to vector<8x1xf32>
    %26 = math.sqrt %25 : vector<8x1xf32>
    %27 = arith.mulf %22, %22 : vector<8x32xf32>
    %cst_11 = arith.constant dense<0.000000e+00> : vector<8xf32>
    %28 = vector.multi_reduction <add>, %27, %cst_11 [1] : vector<8x32xf32> to vector<8xf32>
    %29 = vector.shape_cast %28 : vector<8xf32> to vector<8x1xf32>
    %30 = math.sqrt %29 : vector<8x1xf32>
    %31 = math.sqrt %10 : vector<8x1xf32>
    %32 = math.sqrt %12 : vector<8x1xf32>
    %33 = math.sqrt %14 : vector<8x1xf32>
    %34 = arith.mulf %31, %32 : vector<8x1xf32>
    %cst_12 = arith.constant 9.99999993E-9 : f32
    %35 = vector.broadcast %cst_12 : f32 to vector<8x1xf32>
    %36 = arith.addf %34, %35 : vector<8x1xf32>
    %37 = tpu.reciprocal %36 {approx = true} : vector<8x1xf32> -> vector<8x1xf32>
    %38 = arith.mulf %17, %37 : vector<8x1xf32>
    %39 = arith.mulf %31, %33 : vector<8x1xf32>
    %cst_13 = arith.constant 9.99999993E-9 : f32
    %40 = vector.broadcast %cst_13 : f32 to vector<8x1xf32>
    %41 = arith.addf %39, %40 : vector<8x1xf32>
    %42 = tpu.reciprocal %41 {approx = true} : vector<8x1xf32> -> vector<8x1xf32>
    %43 = arith.mulf %20, %42 : vector<8x1xf32>
    %44 = arith.subf %43, %38 : vector<8x1xf32>
    %45 = arith.negf %44 : vector<8x1xf32>
    %46 = math.exp %45 : vector<8x1xf32>
    %cst_14 = arith.constant 1.000000e+00 : f32
    %47 = vector.broadcast %cst_14 : f32 to vector<8x1xf32>
    %48 = arith.addf %47, %46 : vector<8x1xf32>
    %49 = arith.divf %47, %48 : vector<8x1xf32>
    %cst_15 = arith.constant 2.000000e+00 : f32
    %50 = vector.broadcast %cst_15 : f32 to vector<8x1xf32>
    %51 = arith.mulf %50, %49 : vector<8x1xf32>
    %cst_16 = arith.constant 1.000000e+00 : f32
    %52 = vector.broadcast %cst_16 : f32 to vector<8x1xf32>
    %53 = arith.addf %52, %51 : vector<8x1xf32>
    %54 = arith.subf %26, %30 : vector<8x1xf32>
    %55 = arith.addf %54, %53 : vector<8x1xf32>
    %cst_17 = arith.constant 0.000000e+00 : f32
    %56 = vector.broadcast %cst_17 : f32 to vector<8x1xf32>
    %57 = arith.maximumf %55, %56 : vector<8x1xf32>
    %c0_18 = arith.constant 0 : index
    %c0_19 = arith.constant 0 : index
    %58 = vector.load %arg8[%c0_18, %c0_19] : memref<1x1xf32, #tpu.memory_space<vmem>>, vector<1x1xf32>
    %59 = vector.shape_cast %57 : vector<8x1xf32> to vector<1x8x1xf32>
    %cst_20 = arith.constant dense<0.000000e+00> : vector<1xf32>
    %60 = vector.multi_reduction <add>, %59, %cst_20 [1, 2] : vector<1x8x1xf32> to vector<1xf32>
    %61 = vector.shape_cast %60 : vector<1xf32> to vector<1x1x1xf32>
    %62 = vector.extract %61[0, 0, 0] : f32 from vector<1x1x1xf32>
    %63 = vector.broadcast %62 : f32 to vector<1x1xf32>
    %64 = arith.addf %58, %63 : vector<1x1xf32>
    %c0_21 = arith.constant 0 : index
    %c0_22 = arith.constant 0 : index
    %65 = vector.load %arg8[%c0_21, %c0_22] : memref<1x1xf32, #tpu.memory_space<vmem>>, vector<1x1xf32>
    tpu.vector_store %arg8[%c0_21, %c0_22], %64 {strides = array<i32>} : memref<1x1xf32, #tpu.memory_space<vmem>>, vector<1x1xf32>,
    %c0_23 = arith.constant 0 : index
    %c0_24 = arith.constant 0 : index
    %c0_25 = arith.constant 0 : index
    %66 = vector.load %arg5[%c0_23, %c0_24, %c0_25] : memref<3x1x32xf32, #tpu.memory_space<vmem>>, vector<1x1x32xf32>
    %67 = vector.shape_cast %66 : vector<1x1x32xf32> to vector<1x32xf32>
    %cst_26 = arith.constant dense<0.000000e+00> : vector<32xf32>
    %68 = vector.multi_reduction <add>, %3, %cst_26 [0] : vector<8x32xf32> to vector<32xf32>
    %69 = vector.shape_cast %68 : vector<32xf32> to vector<1x32xf32>
    %70 = arith.addf %67, %69 : vector<1x32xf32>
    %c0_27 = arith.constant 0 : index
    %c0_28 = arith.constant 0 : index
    %c0_29 = arith.constant 0 : index
    %71 = vector.load %arg5[%c0_27, %c0_28, %c0_29] : memref<3x1x32xf32, #tpu.memory_space<vmem>>, vector<1x1x32xf32>
    %72 = vector.shape_cast %71 : vector<1x1x32xf32> to vector<1x32xf32>
    %73 = vector.shape_cast %70 : vector<1x32xf32> to vector<1x1x32xf32>
    tpu.vector_store %arg5[%c0_27, %c0_28, %c0_29], %73 {strides = array<i32>} : memref<3x1x32xf32, #tpu.memory_space<vmem>>, vector<1x1x32xf32>,
    %c0_30 = arith.constant 0 : index
    %c0_31 = arith.constant 0 : index
    %c0_32 = arith.constant 0 : index
    %74 = vector.load %arg6[%c0_30, %c0_31, %c0_32] : memref<3x1x32xf32, #tpu.memory_space<vmem>>, vector<1x1x32xf32>
    %75 = vector.shape_cast %74 : vector<1x1x32xf32> to vector<1x32xf32>
    %cst_33 = arith.constant dense<0.000000e+00> : vector<32xf32>
    %76 = vector.multi_reduction <add>, %6, %cst_33 [0] : vector<8x32xf32> to vector<32xf32>
    %77 = vector.shape_cast %76 : vector<32xf32> to vector<1x32xf32>
    %78 = arith.addf %75, %77 : vector<1x32xf32>
    %c0_34 = arith.constant 0 : index
    %c0_35 = arith.constant 0 : index
    %c0_36 = arith.constant 0 : index
    %79 = vector.load %arg6[%c0_34, %c0_35, %c0_36] : memref<3x1x32xf32, #tpu.memory_space<vmem>>, vector<1x1x32xf32>
    %80 = vector.shape_cast %79 : vector<1x1x32xf32> to vector<1x32xf32>
    %81 = vector.shape_cast %78 : vector<1x32xf32> to vector<1x1x32xf32>
    tpu.vector_store %arg6[%c0_34, %c0_35, %c0_36], %81 {strides = array<i32>} : memref<3x1x32xf32, #tpu.memory_space<vmem>>, vector<1x1x32xf32>,
    %c0_37 = arith.constant 0 : index
    %c0_38 = arith.constant 0 : index
    %82 = vector.load %arg1[%c0_37, %c0_38] : memref<8x32xf32, #tpu.memory_space<vmem>>, vector<8x32xf32>
    %c0_39 = arith.constant 0 : index
    %c0_40 = arith.constant 0 : index
    %c0_41 = arith.constant 0 : index
    %83 = vector.load %arg7[%c0_39, %c0_40, %c0_41] : memref<3x32x32xf32, #tpu.memory_space<vmem>>, vector<1x32x32xf32>
    %84 = vector.shape_cast %83 : vector<1x32x32xf32> to vector<32x32xf32>
    %cst_42 = arith.constant dense<0.000000e+00> : vector<32x32xf32>
    %85 = tpu.matmul %82, %82, %cst_42 {dimension_numbers = #tpu.dot_dimension_numbers<[0], [0], [1], [1], [0, 1, 1, 1], [], []>} : vector<8x32xf32>, vector<8x32xf32>, vector<32x32xf32> -> vector<32x32xf32>
    %86 = arith.addf %84, %85 : vector<32x32xf32>
    %c0_43 = arith.constant 0 : index
    %c0_44 = arith.constant 0 : index
    %c0_45 = arith.constant 0 : index
    %87 = vector.load %arg7[%c0_43, %c0_44, %c0_45] : memref<3x32x32xf32, #tpu.memory_space<vmem>>, vector<1x32x32xf32>
    %88 = vector.shape_cast %87 : vector<1x32x32xf32> to vector<32x32xf32>
    %89 = vector.shape_cast %86 : vector<32x32xf32> to vector<1x32x32xf32>
    tpu.vector_store %arg7[%c0_43, %c0_44, %c0_45], %89 {strides = array<i32>} : memref<3x32x32xf32, #tpu.memory_space<vmem>>, vector<1x32x32xf32>,
    %c1 = arith.constant 1 : index
    %c0_46 = arith.constant 0 : index
    %c0_47 = arith.constant 0 : index
    %90 = vector.load %arg5[%c1, %c0_46, %c0_47] : memref<3x1x32xf32, #tpu.memory_space<vmem>>, vector<1x1x32xf32>
    %91 = vector.shape_cast %90 : vector<1x1x32xf32> to vector<1x32xf32>
    %cst_48 = arith.constant dense<0.000000e+00> : vector<32xf32>
    %92 = vector.multi_reduction <add>, %4, %cst_48 [0] : vector<8x32xf32> to vector<32xf32>
    %93 = vector.shape_cast %92 : vector<32xf32> to vector<1x32xf32>
    %94 = arith.addf %91, %93 : vector<1x32xf32>
    %c1_49 = arith.constant 1 : index
    %c0_50 = arith.constant 0 : index
    %c0_51 = arith.constant 0 : index
    %95 = vector.load %arg5[%c1_49, %c0_50, %c0_51] : memref<3x1x32xf32, #tpu.memory_space<vmem>>, vector<1x1x32xf32>
    %96 = vector.shape_cast %95 : vector<1x1x32xf32> to vector<1x32xf32>
    %97 = vector.shape_cast %94 : vector<1x32xf32> to vector<1x1x32xf32>
    tpu.vector_store %arg5[%c1_49, %c0_50, %c0_51], %97 {strides = array<i32>} : memref<3x1x32xf32, #tpu.memory_space<vmem>>, vector<1x1x32xf32>,
    %c1_52 = arith.constant 1 : index
    %c0_53 = arith.constant 0 : index
    %c0_54 = arith.constant 0 : index
    %98 = vector.load %arg6[%c1_52, %c0_53, %c0_54] : memref<3x1x32xf32, #tpu.memory_space<vmem>>, vector<1x1x32xf32>
    %99 = vector.shape_cast %98 : vector<1x1x32xf32> to vector<1x32xf32>
    %cst_55 = arith.constant dense<0.000000e+00> : vector<32xf32>
    %100 = vector.multi_reduction <add>, %7, %cst_55 [0] : vector<8x32xf32> to vector<32xf32>
    %101 = vector.shape_cast %100 : vector<32xf32> to vector<1x32xf32>
    %102 = arith.addf %99, %101 : vector<1x32xf32>
    %c1_56 = arith.constant 1 : index
    %c0_57 = arith.constant 0 : index
    %c0_58 = arith.constant 0 : index
    %103 = vector.load %arg6[%c1_56, %c0_57, %c0_58] : memref<3x1x32xf32, #tpu.memory_space<vmem>>, vector<1x1x32xf32>
    %104 = vector.shape_cast %103 : vector<1x1x32xf32> to vector<1x32xf32>
    %105 = vector.shape_cast %102 : vector<1x32xf32> to vector<1x1x32xf32>
    tpu.vector_store %arg6[%c1_56, %c0_57, %c0_58], %105 {strides = array<i32>} : memref<3x1x32xf32, #tpu.memory_space<vmem>>, vector<1x1x32xf32>,
    %c0_59 = arith.constant 0 : index
    %c0_60 = arith.constant 0 : index
    %106 = vector.load %arg2[%c0_59, %c0_60] : memref<8x32xf32, #tpu.memory_space<vmem>>, vector<8x32xf32>
    %c1_61 = arith.constant 1 : index
    %c0_62 = arith.constant 0 : index
    %c0_63 = arith.constant 0 : index
    %107 = vector.load %arg7[%c1_61, %c0_62, %c0_63] : memref<3x32x32xf32, #tpu.memory_space<vmem>>, vector<1x32x32xf32>
    %108 = vector.shape_cast %107 : vector<1x32x32xf32> to vector<32x32xf32>
    %cst_64 = arith.constant dense<0.000000e+00> : vector<32x32xf32>
    %109 = tpu.matmul %106, %106, %cst_64 {dimension_numbers = #tpu.dot_dimension_numbers<[0], [0], [1], [1], [0, 1, 1, 1], [], []>} : vector<8x32xf32>, vector<8x32xf32>, vector<32x32xf32> -> vector<32x32xf32>
    %110 = arith.addf %108, %109 : vector<32x32xf32>
    %c1_65 = arith.constant 1 : index
    %c0_66 = arith.constant 0 : index
    %c0_67 = arith.constant 0 : index
    %111 = vector.load %arg7[%c1_65, %c0_66, %c0_67] : memref<3x32x32xf32, #tpu.memory_space<vmem>>, vector<1x32x32xf32>
    %112 = vector.shape_cast %111 : vector<1x32x32xf32> to vector<32x32xf32>
    %113 = vector.shape_cast %110 : vector<32x32xf32> to vector<1x32x32xf32>
    tpu.vector_store %arg7[%c1_65, %c0_66, %c0_67], %113 {strides = array<i32>} : memref<3x32x32xf32, #tpu.memory_space<vmem>>, vector<1x32x32xf32>,
    %c2 = arith.constant 2 : index
    %c0_68 = arith.constant 0 : index
    %c0_69 = arith.constant 0 : index
    %114 = vector.load %arg5[%c2, %c0_68, %c0_69] : memref<3x1x32xf32, #tpu.memory_space<vmem>>, vector<1x1x32xf32>
    %115 = vector.shape_cast %114 : vector<1x1x32xf32> to vector<1x32xf32>
    %cst_70 = arith.constant dense<0.000000e+00> : vector<32xf32>
    %116 = vector.multi_reduction <add>, %5, %cst_70 [0] : vector<8x32xf32> to vector<32xf32>
    %117 = vector.shape_cast %116 : vector<32xf32> to vector<1x32xf32>
    %118 = arith.addf %115, %117 : vector<1x32xf32>
    %c2_71 = arith.constant 2 : index
    %c0_72 = arith.constant 0 : index
    %c0_73 = arith.constant 0 : index
    %119 = vector.load %arg5[%c2_71, %c0_72, %c0_73] : memref<3x1x32xf32, #tpu.memory_space<vmem>>, vector<1x1x32xf32>
    %120 = vector.shape_cast %119 : vector<1x1x32xf32> to vector<1x32xf32>
    %121 = vector.shape_cast %118 : vector<1x32xf32> to vector<1x1x32xf32>
    tpu.vector_store %arg5[%c2_71, %c0_72, %c0_73], %121 {strides = array<i32>} : memref<3x1x32xf32, #tpu.memory_space<vmem>>, vector<1x1x32xf32>,
    %c2_74 = arith.constant 2 : index
    %c0_75 = arith.constant 0 : index
    %c0_76 = arith.constant 0 : index
    %122 = vector.load %arg6[%c2_74, %c0_75, %c0_76] : memref<3x1x32xf32, #tpu.memory_space<vmem>>, vector<1x1x32xf32>
    %123 = vector.shape_cast %122 : vector<1x1x32xf32> to vector<1x32xf32>
    %cst_77 = arith.constant dense<0.000000e+00> : vector<32xf32>
    %124 = vector.multi_reduction <add>, %8, %cst_77 [0] : vector<8x32xf32> to vector<32xf32>
    %125 = vector.shape_cast %124 : vector<32xf32> to vector<1x32xf32>
    %126 = arith.addf %123, %125 : vector<1x32xf32>
    %c2_78 = arith.constant 2 : index
    %c0_79 = arith.constant 0 : index
    %c0_80 = arith.constant 0 : index
    %127 = vector.load %arg6[%c2_78, %c0_79, %c0_80] : memref<3x1x32xf32, #tpu.memory_space<vmem>>, vector<1x1x32xf32>
    %128 = vector.shape_cast %127 : vector<1x1x32xf32> to vector<1x32xf32>
    %129 = vector.shape_cast %126 : vector<1x32xf32> to vector<1x1x32xf32>
    tpu.vector_store %arg6[%c2_78, %c0_79, %c0_80], %129 {strides = array<i32>} : memref<3x1x32xf32, #tpu.memory_space<vmem>>, vector<1x1x32xf32>,
    %c0_81 = arith.constant 0 : index
    %c0_82 = arith.constant 0 : index
    %130 = vector.load %arg3[%c0_81, %c0_82] : memref<8x32xf32, #tpu.memory_space<vmem>>, vector<8x32xf32>
    %c2_83 = arith.constant 2 : index
    %c0_84 = arith.constant 0 : index
    %c0_85 = arith.constant 0 : index
    %131 = vector.load %arg7[%c2_83, %c0_84, %c0_85] : memref<3x32x32xf32, #tpu.memory_space<vmem>>, vector<1x32x32xf32>
    %132 = vector.shape_cast %131 : vector<1x32x32xf32> to vector<32x32xf32>
    %cst_86 = arith.constant dense<0.000000e+00> : vector<32x32xf32>
    %133 = tpu.matmul %130, %130, %cst_86 {dimension_numbers = #tpu.dot_dimension_numbers<[0], [0], [1], [1], [0, 1, 1, 1], [], []>} : vector<8x32xf32>, vector<8x32xf32>, vector<32x32xf32> -> vector<32x32xf32>
    %134 = arith.addf %132, %133 : vector<32x32xf32>
    %c2_87 = arith.constant 2 : index
    %c0_88 = arith.constant 0 : index
    %c0_89 = arith.constant 0 : index
    %135 = vector.load %arg7[%c2_87, %c0_88, %c0_89] : memref<3x32x32xf32, #tpu.memory_space<vmem>>, vector<1x32x32xf32>
    %136 = vector.shape_cast %135 : vector<1x32x32xf32> to vector<32x32xf32>
    %137 = vector.shape_cast %134 : vector<32x32xf32> to vector<1x32x32xf32>
    tpu.vector_store %arg7[%c2_87, %c0_88, %c0_89], %137 {strides = array<i32>} : memref<3x32x32xf32, #tpu.memory_space<vmem>>, vector<1x32x32xf32>,
    %c1_i32 = arith.constant 1 : i32
    %138 = arith.cmpi eq, %arg0, %c1_i32 : i32
    %139 = arith.extui %138 : i1 to i32
    %c0_i32_90 = arith.constant 0 : i32
    %140 = arith.cmpi ne, %139, %c0_i32_90 : i32
    scf.if %140 {
      %c0_91 = arith.constant 0 : index
      %c0_92 = arith.constant 0 : index
      %c0_93 = arith.constant 0 : index
      %141 = vector.load %arg5[%c0_91, %c0_92, %c0_93] : memref<3x1x32xf32, #tpu.memory_space<vmem>>, vector<1x1x32xf32>
      %142 = vector.shape_cast %141 : vector<1x1x32xf32> to vector<1x32xf32>
      %cst_94 = arith.constant 6.250000e-02 : f32
      %143 = vector.broadcast %cst_94 : f32 to vector<1x32xf32>
      %144 = arith.mulf %142, %143 : vector<1x32xf32>
      %c0_95 = arith.constant 0 : index
      %c0_96 = arith.constant 0 : index
      %c0_97 = arith.constant 0 : index
      %145 = vector.load %arg6[%c0_95, %c0_96, %c0_97] : memref<3x1x32xf32, #tpu.memory_space<vmem>>, vector<1x1x32xf32>
      %146 = vector.shape_cast %145 : vector<1x1x32xf32> to vector<1x32xf32>
      %cst_98 = arith.constant 1.600000e+01 : f32
      %147 = vector.broadcast %cst_98 : f32 to vector<1x32xf32>
      %148 = arith.mulf %147, %144 : vector<1x32xf32>
      %149 = arith.mulf %148, %144 : vector<1x32xf32>
      %150 = arith.subf %146, %149 : vector<1x32xf32>
      %cst_99 = arith.constant 0.0666666701 : f32
      %151 = vector.broadcast %cst_99 : f32 to vector<1x32xf32>
      %152 = arith.mulf %150, %151 : vector<1x32xf32>
      %cst_100 = arith.constant 0.000000e+00 : f32
      %153 = vector.broadcast %cst_100 : f32 to vector<1x32xf32>
      %154 = arith.maximumf %152, %153 : vector<1x32xf32>
      %cst_101 = arith.constant 9.99999974E-5 : f32
      %155 = vector.broadcast %cst_101 : f32 to vector<1x32xf32>
      %156 = arith.addf %154, %155 : vector<1x32xf32>
      %157 = math.sqrt %156 : vector<1x32xf32>
      %cst_102 = arith.constant 1.000000e+00 : f32
      %158 = vector.broadcast %cst_102 : f32 to vector<1x32xf32>
      %159 = arith.subf %158, %157 : vector<1x32xf32>
      %cst_103 = arith.constant 0.000000e+00 : f32
      %160 = vector.broadcast %cst_103 : f32 to vector<1x32xf32>
      %161 = arith.maximumf %159, %160 : vector<1x32xf32>
      %162 = vector.shape_cast %161 : vector<1x32xf32> to vector<1x1x32xf32>
      %cst_104 = arith.constant dense<0.000000e+00> : vector<1xf32>
      %163 = vector.multi_reduction <add>, %162, %cst_104 [1, 2] : vector<1x1x32xf32> to vector<1xf32>
      %164 = vector.shape_cast %163 : vector<1xf32> to vector<1x1x1xf32>
      %165 = vector.extract %164[0, 0, 0] : f32 from vector<1x1x1xf32>
      %cst_105 = arith.constant 0.000000e+00 : f32
      %166 = arith.addf %cst_105, %165 : f32
      %167 = arith.mulf %152, %152 : vector<1x32xf32>
      %168 = vector.shape_cast %167 : vector<1x32xf32> to vector<1x1x32xf32>
      %cst_106 = arith.constant dense<0.000000e+00> : vector<1xf32>
      %169 = vector.multi_reduction <add>, %168, %cst_106 [1, 2] : vector<1x1x32xf32> to vector<1xf32>
      %170 = vector.shape_cast %169 : vector<1xf32> to vector<1x1x1xf32>
      %171 = vector.extract %170[0, 0, 0] : f32 from vector<1x1x1xf32>
      %cst_107 = arith.constant 0.000000e+00 : f32
      %172 = arith.addf %cst_107, %171 : f32
      %c0_108 = arith.constant 0 : index
      %c0_109 = arith.constant 0 : index
      %c0_110 = arith.constant 0 : index
      %173 = vector.load %arg7[%c0_108, %c0_109, %c0_110] : memref<3x32x32xf32, #tpu.memory_space<vmem>>, vector<1x32x32xf32>
      %174 = vector.shape_cast %173 : vector<1x32x32xf32> to vector<32x32xf32>
      %175 = arith.mulf %174, %174 : vector<32x32xf32>
      %176 = vector.shape_cast %175 : vector<32x32xf32> to vector<1x32x32xf32>
      %cst_111 = arith.constant dense<0.000000e+00> : vector<1xf32>
      %177 = vector.multi_reduction <add>, %176, %cst_111 [1, 2] : vector<1x32x32xf32> to vector<1xf32>
      %178 = vector.shape_cast %177 : vector<1xf32> to vector<1x1x1xf32>
      %179 = vector.extract %178[0, 0, 0] : f32 from vector<1x1x1xf32>
      %cst_112 = arith.constant dense<0.000000e+00> : vector<1x32xf32>
      %180 = tpu.matmul %144, %174, %cst_112 {dimension_numbers = #tpu.dot_dimension_numbers<[1], [0], [0], [1], [0, 0, 1, 1], [], []>} : vector<1x32xf32>, vector<32x32xf32>, vector<1x32xf32> -> vector<1x32xf32>
      %181 = arith.mulf %180, %144 : vector<1x32xf32>
      %182 = vector.shape_cast %181 : vector<1x32xf32> to vector<1x1x32xf32>
      %cst_113 = arith.constant dense<0.000000e+00> : vector<1xf32>
      %183 = vector.multi_reduction <add>, %182, %cst_113 [1, 2] : vector<1x1x32xf32> to vector<1xf32>
      %184 = vector.shape_cast %183 : vector<1xf32> to vector<1x1x1xf32>
      %185 = vector.extract %184[0, 0, 0] : f32 from vector<1x1x1xf32>
      %186 = arith.mulf %144, %144 : vector<1x32xf32>
      %187 = vector.shape_cast %186 : vector<1x32xf32> to vector<1x1x32xf32>
      %cst_114 = arith.constant dense<0.000000e+00> : vector<1xf32>
      %188 = vector.multi_reduction <add>, %187, %cst_114 [1, 2] : vector<1x1x32xf32> to vector<1xf32>
      %189 = vector.shape_cast %188 : vector<1xf32> to vector<1x1x1xf32>
      %190 = vector.extract %189[0, 0, 0] : f32 from vector<1x1x1xf32>
      %cst_115 = arith.constant 3.200000e+01 : f32
      %191 = arith.mulf %cst_115, %185 : f32
      %192 = arith.subf %179, %191 : f32
      %cst_116 = arith.constant 2.560000e+02 : f32
      %193 = arith.mulf %cst_116, %190 : f32
      %194 = arith.mulf %193, %190 : f32
      %195 = arith.addf %192, %194 : f32
      %cst_117 = arith.constant 0.00444444455 : f32
      %196 = arith.mulf %195, %cst_117 : f32
      %cst_118 = arith.constant 0.000000e+00 : f32
      %197 = arith.addf %cst_118, %196 : f32
      %c1_119 = arith.constant 1 : index
      %c0_120 = arith.constant 0 : index
      %c0_121 = arith.constant 0 : index
      %198 = vector.load %arg5[%c1_119, %c0_120, %c0_121] : memref<3x1x32xf32, #tpu.memory_space<vmem>>, vector<1x1x32xf32>
      %199 = vector.shape_cast %198 : vector<1x1x32xf32> to vector<1x32xf32>
      %cst_122 = arith.constant 6.250000e-02 : f32
      %200 = vector.broadcast %cst_122 : f32 to vector<1x32xf32>
      %201 = arith.mulf %199, %200 : vector<1x32xf32>
      %c1_123 = arith.constant 1 : index
      %c0_124 = arith.constant 0 : index
      %c0_125 = arith.constant 0 : index
      %202 = vector.load %arg6[%c1_123, %c0_124, %c0_125] : memref<3x1x32xf32, #tpu.memory_space<vmem>>, vector<1x1x32xf32>
      %203 = vector.shape_cast %202 : vector<1x1x32xf32> to vector<1x32xf32>
      %cst_126 = arith.constant 1.600000e+01 : f32
      %204 = vector.broadcast %cst_126 : f32 to vector<1x32xf32>
      %205 = arith.mulf %204, %201 : vector<1x32xf32>
      %206 = arith.mulf %205, %201 : vector<1x32xf32>
      %207 = arith.subf %203, %206 : vector<1x32xf32>
      %cst_127 = arith.constant 0.0666666701 : f32
      %208 = vector.broadcast %cst_127 : f32 to vector<1x32xf32>
      %209 = arith.mulf %207, %208 : vector<1x32xf32>
      %cst_128 = arith.constant 0.000000e+00 : f32
      %210 = vector.broadcast %cst_128 : f32 to vector<1x32xf32>
      %211 = arith.maximumf %209, %210 : vector<1x32xf32>
      %cst_129 = arith.constant 9.99999974E-5 : f32
      %212 = vector.broadcast %cst_129 : f32 to vector<1x32xf32>
      %213 = arith.addf %211, %212 : vector<1x32xf32>
      %214 = math.sqrt %213 : vector<1x32xf32>
      %cst_130 = arith.constant 1.000000e+00 : f32
      %215 = vector.broadcast %cst_130 : f32 to vector<1x32xf32>
      %216 = arith.subf %215, %214 : vector<1x32xf32>
      %cst_131 = arith.constant 0.000000e+00 : f32
      %217 = vector.broadcast %cst_131 : f32 to vector<1x32xf32>
      %218 = arith.maximumf %216, %217 : vector<1x32xf32>
      %219 = vector.shape_cast %218 : vector<1x32xf32> to vector<1x1x32xf32>
      %cst_132 = arith.constant dense<0.000000e+00> : vector<1xf32>
      %220 = vector.multi_reduction <add>, %219, %cst_132 [1, 2] : vector<1x1x32xf32> to vector<1xf32>
      %221 = vector.shape_cast %220 : vector<1xf32> to vector<1x1x1xf32>
      %222 = vector.extract %221[0, 0, 0] : f32 from vector<1x1x1xf32>
      %223 = arith.addf %166, %222 : f32
      %224 = arith.mulf %209, %209 : vector<1x32xf32>
      %225 = vector.shape_cast %224 : vector<1x32xf32> to vector<1x1x32xf32>
      %cst_133 = arith.constant dense<0.000000e+00> : vector<1xf32>
      %226 = vector.multi_reduction <add>, %225, %cst_133 [1, 2] : vector<1x1x32xf32> to vector<1xf32>
      %227 = vector.shape_cast %226 : vector<1xf32> to vector<1x1x1xf32>
      %228 = vector.extract %227[0, 0, 0] : f32 from vector<1x1x1xf32>
      %229 = arith.addf %172, %228 : f32
      %c1_134 = arith.constant 1 : index
      %c0_135 = arith.constant 0 : index
      %c0_136 = arith.constant 0 : index
      %230 = vector.load %arg7[%c1_134, %c0_135, %c0_136] : memref<3x32x32xf32, #tpu.memory_space<vmem>>, vector<1x32x32xf32>
      %231 = vector.shape_cast %230 : vector<1x32x32xf32> to vector<32x32xf32>
      %232 = arith.mulf %231, %231 : vector<32x32xf32>
      %233 = vector.shape_cast %232 : vector<32x32xf32> to vector<1x32x32xf32>
      %cst_137 = arith.constant dense<0.000000e+00> : vector<1xf32>
      %234 = vector.multi_reduction <add>, %233, %cst_137 [1, 2] : vector<1x32x32xf32> to vector<1xf32>
      %235 = vector.shape_cast %234 : vector<1xf32> to vector<1x1x1xf32>
      %236 = vector.extract %235[0, 0, 0] : f32 from vector<1x1x1xf32>
      %cst_138 = arith.constant dense<0.000000e+00> : vector<1x32xf32>
      %237 = tpu.matmul %201, %231, %cst_138 {dimension_numbers = #tpu.dot_dimension_numbers<[1], [0], [0], [1], [0, 0, 1, 1], [], []>} : vector<1x32xf32>, vector<32x32xf32>, vector<1x32xf32> -> vector<1x32xf32>
      %238 = arith.mulf %237, %201 : vector<1x32xf32>
      %239 = vector.shape_cast %238 : vector<1x32xf32> to vector<1x1x32xf32>
      %cst_139 = arith.constant dense<0.000000e+00> : vector<1xf32>
      %240 = vector.multi_reduction <add>, %239, %cst_139 [1, 2] : vector<1x1x32xf32> to vector<1xf32>
      %241 = vector.shape_cast %240 : vector<1xf32> to vector<1x1x1xf32>
      %242 = vector.extract %241[0, 0, 0] : f32 from vector<1x1x1xf32>
      %243 = arith.mulf %201, %201 : vector<1x32xf32>
      %244 = vector.shape_cast %243 : vector<1x32xf32> to vector<1x1x32xf32>
      %cst_140 = arith.constant dense<0.000000e+00> : vector<1xf32>
      %245 = vector.multi_reduction <add>, %244, %cst_140 [1, 2] : vector<1x1x32xf32> to vector<1xf32>
      %246 = vector.shape_cast %245 : vector<1xf32> to vector<1x1x1xf32>
      %247 = vector.extract %246[0, 0, 0] : f32 from vector<1x1x1xf32>
      %cst_141 = arith.constant 3.200000e+01 : f32
      %248 = arith.mulf %cst_141, %242 : f32
      %249 = arith.subf %236, %248 : f32
      %cst_142 = arith.constant 2.560000e+02 : f32
      %250 = arith.mulf %cst_142, %247 : f32
      %251 = arith.mulf %250, %247 : f32
      %252 = arith.addf %249, %251 : f32
      %cst_143 = arith.constant 0.00444444455 : f32
      %253 = arith.mulf %252, %cst_143 : f32
      %254 = arith.addf %197, %253 : f32
      %c2_144 = arith.constant 2 : index
      %c0_145 = arith.constant 0 : index
      %c0_146 = arith.constant 0 : index
      %255 = vector.load %arg5[%c2_144, %c0_145, %c0_146] : memref<3x1x32xf32, #tpu.memory_space<vmem>>, vector<1x1x32xf32>
      %256 = vector.shape_cast %255 : vector<1x1x32xf32> to vector<1x32xf32>
      %cst_147 = arith.constant 6.250000e-02 : f32
      %257 = vector.broadcast %cst_147 : f32 to vector<1x32xf32>
      %258 = arith.mulf %256, %257 : vector<1x32xf32>
      %c2_148 = arith.constant 2 : index
      %c0_149 = arith.constant 0 : index
      %c0_150 = arith.constant 0 : index
      %259 = vector.load %arg6[%c2_148, %c0_149, %c0_150] : memref<3x1x32xf32, #tpu.memory_space<vmem>>, vector<1x1x32xf32>
      %260 = vector.shape_cast %259 : vector<1x1x32xf32> to vector<1x32xf32>
      %cst_151 = arith.constant 1.600000e+01 : f32
      %261 = vector.broadcast %cst_151 : f32 to vector<1x32xf32>
      %262 = arith.mulf %261, %258 : vector<1x32xf32>
      %263 = arith.mulf %262, %258 : vector<1x32xf32>
      %264 = arith.subf %260, %263 : vector<1x32xf32>
      %cst_152 = arith.constant 0.0666666701 : f32
      %265 = vector.broadcast %cst_152 : f32 to vector<1x32xf32>
      %266 = arith.mulf %264, %265 : vector<1x32xf32>
      %cst_153 = arith.constant 0.000000e+00 : f32
      %267 = vector.broadcast %cst_153 : f32 to vector<1x32xf32>
      %268 = arith.maximumf %266, %267 : vector<1x32xf32>
      %cst_154 = arith.constant 9.99999974E-5 : f32
      %269 = vector.broadcast %cst_154 : f32 to vector<1x32xf32>
      %270 = arith.addf %268, %269 : vector<1x32xf32>
      %271 = math.sqrt %270 : vector<1x32xf32>
      %cst_155 = arith.constant 1.000000e+00 : f32
      %272 = vector.broadcast %cst_155 : f32 to vector<1x32xf32>
      %273 = arith.subf %272, %271 : vector<1x32xf32>
      %cst_156 = arith.constant 0.000000e+00 : f32
      %274 = vector.broadcast %cst_156 : f32 to vector<1x32xf32>
      %275 = arith.maximumf %273, %274 : vector<1x32xf32>
      %276 = vector.shape_cast %275 : vector<1x32xf32> to vector<1x1x32xf32>
      %cst_157 = arith.constant dense<0.000000e+00> : vector<1xf32>
      %277 = vector.multi_reduction <add>, %276, %cst_157 [1, 2] : vector<1x1x32xf32> to vector<1xf32>
      %278 = vector.shape_cast %277 : vector<1xf32> to vector<1x1x1xf32>
      %279 = vector.extract %278[0, 0, 0] : f32 from vector<1x1x1xf32>
      %280 = arith.addf %223, %279 : f32
      %281 = arith.mulf %266, %266 : vector<1x32xf32>
      %282 = vector.shape_cast %281 : vector<1x32xf32> to vector<1x1x32xf32>
      %cst_158 = arith.constant dense<0.000000e+00> : vector<1xf32>
      %283 = vector.multi_reduction <add>, %282, %cst_158 [1, 2] : vector<1x1x32xf32> to vector<1xf32>
      %284 = vector.shape_cast %283 : vector<1xf32> to vector<1x1x1xf32>
      %285 = vector.extract %284[0, 0, 0] : f32 from vector<1x1x1xf32>
      %286 = arith.addf %229, %285 : f32
      %c2_159 = arith.constant 2 : index
      %c0_160 = arith.constant 0 : index
      %c0_161 = arith.constant 0 : index
      %287 = vector.load %arg7[%c2_159, %c0_160, %c0_161] : memref<3x32x32xf32, #tpu.memory_space<vmem>>, vector<1x32x32xf32>
      %288 = vector.shape_cast %287 : vector<1x32x32xf32> to vector<32x32xf32>
      %289 = arith.mulf %288, %288 : vector<32x32xf32>
      %290 = vector.shape_cast %289 : vector<32x32xf32> to vector<1x32x32xf32>
      %cst_162 = arith.constant dense<0.000000e+00> : vector<1xf32>
      %291 = vector.multi_reduction <add>, %290, %cst_162 [1, 2] : vector<1x32x32xf32> to vector<1xf32>
      %292 = vector.shape_cast %291 : vector<1xf32> to vector<1x1x1xf32>
      %293 = vector.extract %292[0, 0, 0] : f32 from vector<1x1x1xf32>
      %cst_163 = arith.constant dense<0.000000e+00> : vector<1x32xf32>
      %294 = tpu.matmul %258, %288, %cst_163 {dimension_numbers = #tpu.dot_dimension_numbers<[1], [0], [0], [1], [0, 0, 1, 1], [], []>} : vector<1x32xf32>, vector<32x32xf32>, vector<1x32xf32> -> vector<1x32xf32>
      %295 = arith.mulf %294, %258 : vector<1x32xf32>
      %296 = vector.shape_cast %295 : vector<1x32xf32> to vector<1x1x32xf32>
      %cst_164 = arith.constant dense<0.000000e+00> : vector<1xf32>
      %297 = vector.multi_reduction <add>, %296, %cst_164 [1, 2] : vector<1x1x32xf32> to vector<1xf32>
      %298 = vector.shape_cast %297 : vector<1xf32> to vector<1x1x1xf32>
      %299 = vector.extract %298[0, 0, 0] : f32 from vector<1x1x1xf32>
      %300 = arith.mulf %258, %258 : vector<1x32xf32>
      %301 = vector.shape_cast %300 : vector<1x32xf32> to vector<1x1x32xf32>
      %cst_165 = arith.constant dense<0.000000e+00> : vector<1xf32>
      %302 = vector.multi_reduction <add>, %301, %cst_165 [1, 2] : vector<1x1x32xf32> to vector<1xf32>
      %303 = vector.shape_cast %302 : vector<1xf32> to vector<1x1x1xf32>
      %304 = vector.extract %303[0, 0, 0] : f32 from vector<1x1x1xf32>
      %cst_166 = arith.constant 3.200000e+01 : f32
      %305 = arith.mulf %cst_166, %299 : f32
      %306 = arith.subf %293, %305 : f32
      %cst_167 = arith.constant 2.560000e+02 : f32
      %307 = arith.mulf %cst_167, %304 : f32
      %308 = arith.mulf %307, %304 : f32
      %309 = arith.addf %306, %308 : f32
      %cst_168 = arith.constant 0.00444444455 : f32
      %310 = arith.mulf %309, %cst_168 : f32
      %311 = arith.addf %254, %310 : f32
      %cst_169 = arith.constant 0.010416667 : f32
      %312 = arith.mulf %280, %cst_169 : f32
      %313 = arith.subf %311, %286 : f32
      %cst_170 = arith.constant 0.010416667 : f32
      %314 = arith.mulf %313, %cst_170 : f32
      %c0_171 = arith.constant 0 : index
      %c0_172 = arith.constant 0 : index
      %315 = vector.load %arg8[%c0_171, %c0_172] : memref<1x1xf32, #tpu.memory_space<vmem>>, vector<1x1xf32>
      %cst_173 = arith.constant 6.250000e-02 : f32
      %316 = vector.broadcast %cst_173 : f32 to vector<1x1xf32>
      %317 = arith.mulf %315, %316 : vector<1x1xf32>
      %cst_174 = arith.constant 2.000000e+01 : f32
      %318 = vector.broadcast %cst_174 : f32 to vector<1x1xf32>
      %319 = arith.mulf %318, %317 : vector<1x1xf32>
      %cst_175 = arith.constant 5.000000e+00 : f32
      %320 = arith.mulf %cst_175, %314 : f32
      %321 = vector.broadcast %320 : f32 to vector<1x1xf32>
      %322 = arith.addf %319, %321 : vector<1x1xf32>
      %cst_176 = arith.constant 1.000000e+00 : f32
      %323 = arith.mulf %cst_176, %312 : f32
      %324 = vector.broadcast %323 : f32 to vector<1x1xf32>
      %325 = arith.addf %322, %324 : vector<1x1xf32>
      %c0_177 = arith.constant 0 : index
      %c0_178 = arith.constant 0 : index
      %326 = vector.load %arg4[%c0_177, %c0_178] : memref<1x1xf32, #tpu.memory_space<vmem>>, vector<1x1xf32>
      tpu.vector_store %arg4[%c0_177, %c0_178], %325 {strides = array<i32>} : memref<1x1xf32, #tpu.memory_space<vmem>>, vector<1x1xf32>,
    } else {
    }
    return
  }
  func.func @transform_0(%arg0: i32) -> (i32, i32) {
    %c0_i32 = arith.constant 0 : i32
    %c0_i32_0 = arith.constant 0 : i32
    return %arg0, %c0_i32 : i32, i32
  }
  func.func @transform_1(%arg0: i32) -> (i32, i32) {
    %c0_i32 = arith.constant 0 : i32
    %c0_i32_0 = arith.constant 0 : i32
    return %arg0, %c0_i32 : i32, i32
  }
  func.func @transform_2(%arg0: i32) -> (i32, i32) {
    %c0_i32 = arith.constant 0 : i32
    %c0_i32_0 = arith.constant 0 : i32
    return %arg0, %c0_i32 : i32, i32
  }
  func.func @transform_3(%arg0: i32) -> (i32, i32) {
    %c0_i32 = arith.constant 0 : i32
    %c0_i32_0 = arith.constant 0 : i32
    %c0_i32_1 = arith.constant 0 : i32
    return %c0_i32, %c0_i32_0 : i32, i32
  }
}

</mosaic_0001>

<llo_original>
// kernel: m2fnet_audio_embedding_loss.1
$region0: #{m2fnet_audio_embedding_loss.1}
  #allocation0 [shape = 'u32[]', space=smem, size = 0x4, offset = 0x4, fixed_abs, tag = 'smem constant byte address 0x4 - core index']
  #allocation1 [shape = 'u32[144,128]{1,0:T(1,128)}', space=vmem, size = 0x12000, scoped, tag = 'internal scratch']
  #allocation2 [shape = 'f32[3,1,32]{2,1,0:T(1,128)}', space=vmem, size = 0x600, scoped, tag = 'scratch operand']
  #allocation3 [shape = 'f32[3,1,32]{2,1,0:T(1,128)}', space=vmem, size = 0x600, scoped, tag = 'scratch operand']
  #allocation4 [shape = 'f32[3,32,32]{2,1,0:T(8,128)}', space=vmem, size = 0xc000, scoped, tag = 'scratch operand']
  #allocation5 [shape = 'f32[1,1]{1,0:T(1,128)}', space=vmem, size = 0x200, scoped, tag = 'scratch operand']
  %s0 = inlined_call_operand.hbm [shape: f32[16,32], index: 0, kind: input, shape index: {}]
  %s1 = inlined_call_operand.hbm [shape: f32[16,32], index: 1, kind: input, shape index: {}]
  %s2 = inlined_call_operand.hbm [shape: f32[16,32], index: 2, kind: input, shape index: {}]
  %s3 = inlined_call_operand.hbm [shape: f32[1,1], index: 3, kind: output, shape index: {}]
  %s4 = sld [smem:[#allocation0]]
  $region65: #{m2fnet_audio_embedding_loss.1} parent=0
    _
  %s6 = ssub.s32 1, %s4
  %s7 = scalar_select 0, %s6, %s4
  $region1: #{m2fnet_audio_embedding_loss.1} parent=0
    #allocation6 [shape = 'u8[8192]{0}', space=vmem, size = 0x2000, scoped, tag = 'input window, operand 0']
    #allocation7 [shape = 's32[2]{0}', space=sflag, size = 0x8, scoped, tag = 'scoped memory for m2fnet_audio_embedding_loss.1']
    #allocation8 [shape = 's32[2]{0}', space=sflag, size = 0x8, scoped, tag = 'scoped memory for m2fnet_audio_embedding_loss.1']
    #allocation9 [shape = 'u8[8192]{0}', space=vmem, size = 0x2000, scoped, tag = 'input window, operand 1']
    #allocation10 [shape = 's32[2]{0}', space=sflag, size = 0x8, scoped, tag = 'scoped memory for m2fnet_audio_embedding_loss.1']
    #allocation11 [shape = 'u8[8192]{0}', space=vmem, size = 0x2000, scoped, tag = 'input window, operand 2']
    #allocation12 [shape = 'u8[512]{0}', space=vmem, size = 0x400, scoped, tag = 'output window, operand 0, single buffered']
    %8 = vsyncpa [#allocation7], 0
    %s9 = scalar_lea.sflag [#allocation7], 1
    %10 = vsyncpa %s9, 0
    %11 = vsyncpa [#allocation10], 0
    %s12 = scalar_lea.sflag [#allocation10], 1
    %13 = vsyncpa %s12, 0
    %14 = vsyncpa [#allocation8], 0
    loop: start=0, step=1, limit=4
    $region2: #{m2fnet_audio_embedding_loss.1} parent=1 // loop_pre_header
      _
    $region3: #{m2fnet_audio_embedding_loss.1} parent=1 // loop_header
      %s16 = sphi 0, %s20
      %p17 = scmp.ge.s32.totalorder %s16, 4
      %s26 = sphi 0, %s28
      %s29 = sphi 0, %s26
      %s30 = sphi 0, %s29
      %s46 = sphi 0, %s30
      %s52 = sphi 0, %s54
      %s55 = sphi 0, %s52
      %s56 = sphi 0, %s55
      %s72 = sphi 0, %s56
      %s78 = sphi 0, %s80
      %s81 = sphi 0, %s78
      %s82 = sphi 0, %s81
      %s98 = sphi 0, %s82
      %s102 = sphi 0, %s102
      %s104 = sphi 0, %s102
      %s105 = sphi 0, %s104
      %s119 = sphi 0, %s105
    $region4: #{m2fnet_audio_embedding_loss.1} parent=1 // loop_header_branch
      %19 = sbr.rel (%p17) target = $region8
    $region5: #{m2fnet_audio_embedding_loss.1} parent=1 // loop_body
      %s21 = ssub.s32 %s16, 1
      %s22 = ssub.s32 %s16, 2
      %s23 = sadd.s32 %s16, 1
      %s24 = ssub.s32 %s16, %s23
      %p25 = scmp.eq.s32.totalorder %s24, 0
      %s27 = sadd.s32 %s26, 1
      %s28 = scalar_select %p25, %s26, %s27
      %p31 = pneg %p25
      %p32 = scmp.eq.s32.totalorder %s16, 1
      %p33 = por %p31, %p32
      %p34 = scmp.ne.s32.totalorder %s26, %s29
      %p35 = scmp.eq.s32.totalorder %s16, 0
      %p36 = por %p34, %p35
      %p37 = scmp.ne.s32.totalorder %s26, %s29
      %p38 = scmp.eq.s32.totalorder %s21, 1
      %p39 = por %p37, %p38
      %p40 = scmp.ne.s32.totalorder %s29, %s30
      %p41 = scmp.eq.s32.totalorder %s21, 0
      %p42 = por %p40, %p41
      %p43 = scmp.ne.s32.totalorder %s29, %s30
      %p44 = scmp.eq.s32.totalorder %s22, 1
      %p45 = por %p43, %p44
      %p47 = scmp.ne.s32.totalorder %s30, %s46
      %p48 = scmp.eq.s32.totalorder %s22, 0
      %p49 = por %p47, %p48
      %s50 = ssub.s32 %s16, %s23
      %p51 = scmp.eq.s32.totalorder %s50, 0
      %s53 = sadd.s32 %s52, 1
      %s54 = scalar_select %p51, %s52, %s53
      %p57 = pneg %p51
      %p58 = scmp.eq.s32.totalorder %s16, 1
      %p59 = por %p57, %p58
      %p60 = scmp.ne.s32.totalorder %s52, %s55
      %p61 = scmp.eq.s32.totalorder %s16, 0
      %p62 = por %p60, %p61
      %p63 = scmp.ne.s32.totalorder %s52, %s55
      %p64 = scmp.eq.s32.totalorder %s21, 1
      %p65 = por %p63, %p64
      %p66 = scmp.ne.s32.totalorder %s55, %s56
      %p67 = scmp.eq.s32.totalorder %s21, 0
      %p68 = por %p66, %p67
      %p69 = scmp.ne.s32.totalorder %s55, %s56
      %p70 = scmp.eq.s32.totalorder %s22, 1
      %p71 = por %p69, %p70
      %p73 = scmp.ne.s32.totalorder %s56, %s72
      %p74 = scmp.eq.s32.totalorder %s22, 0
      %p75 = por %p73, %p74
      %s76 = ssub.s32 %s16, %s23
      %p77 = scmp.eq.s32.totalorder %s76, 0
      %s79 = sadd.s32 %s78, 1
      %s80 = scalar_select %p77, %s78, %s79
      %p83 = pneg %p77
      %p84 = scmp.eq.s32.totalorder %s16, 1
      %p85 = por %p83, %p84
      %p86 = scmp.ne.s32.totalorder %s78, %s81
      %p87 = scmp.eq.s32.totalorder %s16, 0
      %p88 = por %p86, %p87
      %p89 = scmp.ne.s32.totalorder %s78, %s81
      %p90 = scmp.eq.s32.totalorder %s21, 1
      %p91 = por %p89, %p90
      %p92 = scmp.ne.s32.totalorder %s81, %s82
      %p93 = scmp.eq.s32.totalorder %s21, 0
      %p94 = por %p92, %p93
      %p95 = scmp.ne.s32.totalorder %s81, %s82
      %p96 = scmp.eq.s32.totalorder %s22, 1
      %p97 = por %p95, %p96
      %p99 = scmp.ne.s32.totalorder %s82, %s98
      %p100 = scmp.eq.s32.totalorder %s22, 0
      %p101 = por %p99, %p100
      %s103 = sadd.s32 %s102, 1
      %p106 = scmp.eq.s32.totalorder %s16, 1
      %p107 = scmp.ne.s32.totalorder %s102, %s104
      %p108 = scmp.eq.s32.totalorder %s16, 0
      %p109 = por %p107, %p108
      %p110 = scmp.ne.s32.totalorder %s102, %s104
      %p111 = scmp.eq.s32.totalorder %s21, 1
      %p112 = por %p110, %p111
      %p113 = scmp.ne.s32.totalorder %s104, %s105
      %p114 = scmp.eq.s32.totalorder %s21, 0
      %p115 = por %p113, %p114
      %p116 = scmp.ne.s32.totalorder %s104, %s105
      %p117 = scmp.eq.s32.totalorder %s22, 1
      %p118 = por %p116, %p117
      %p120 = scmp.ne.s32.totalorder %s105, %s119
      %p121 = scmp.eq.s32.totalorder %s22, 0
      %p122 = por %p120, %p121
      %p123 = scmp.le.s32.totalorder 1, %s16
      %p124 = scmp.lt.s32.totalorder %s16, 3
      %p125 = pnand %p123, %p124
      %p126 = pneg %p125
      // Predicated region
      $region9: #{m2fnet_audio_embedding_loss.1} parent=5 // pred_check
        _
      $region10: #{m2fnet_audio_embedding_loss.1} parent=5 // pred_check_branch
        %128 = sbr.rel (%p125) target = $region12
      $region11: #{m2fnet_audio_embedding_loss.1} parent=5 // pred_region
        %s129 = ssub.s32 %s16, 1
      $region12: #{m2fnet_audio_embedding_loss.1} parent=5 // pred_fallthru
        _
      %p130 = scmp.lt.s32.totalorder %s16, 2
      // Predicated region
      $region13: #{m2fnet_audio_embedding_loss.1} parent=5 // pred_check
        %p131 = pneg %p130
      $region14: #{m2fnet_audio_embedding_loss.1} parent=5 // pred_check_branch
        %133 = sbr.rel (%p131) target = $region16
      $region15: #{m2fnet_audio_embedding_loss.1} parent=5 // pred_region
        // Predicated region
        $region17: #{m2fnet_audio_embedding_loss.1} parent=15 // pred_check
          %p134 = pneg %p36
        $region18: #{m2fnet_audio_embedding_loss.1} parent=15 // pred_check_branch
          %136 = sbr.rel (%p134) target = $region20
        $region19: #{m2fnet_audio_embedding_loss.1} parent=15 // pred_region
          %s137 = sand.u32 %s26, 1
          %s138 = scalar_lea.sflag [#allocation7], %s137
          %s139 = sand.u32 %s26, 1
          %s140 = smul.addr %s139, 8
          %s141 = scalar_lea.vmem [#allocation6], %s140
          %s143 = ssub.s32 128, 128
          %144 = vsyncadd %s138, %s143
          %s145 = smul.addr %s16, 128
          %s146 = scalar_lea.hbm %s0, %s145
          %s148 = sshll.u32 %s141, 4
          %s149 = int_to_ptr.vmem [resolvable:$true] %s148
          %151 = dma.hbm_to_vmem [thread:$0]  %s146, 128, %s149, %s138
        $region20: #{m2fnet_audio_embedding_loss.1} parent=15 // pred_fallthru
          _
        // Predicated region
        $region21: #{m2fnet_audio_embedding_loss.1} parent=15 // pred_check
          %p152 = pneg %p62
        $region22: #{m2fnet_audio_embedding_loss.1} parent=15 // pred_check_branch
          %154 = sbr.rel (%p152) target = $region24
        $region23: #{m2fnet_audio_embedding_loss.1} parent=15 // pred_region
          %s155 = sand.u32 %s16, 1
          %s156 = scalar_lea.sflag [#allocation10], %s155
          %s157 = sand.u32 %s52, 1
          %s158 = smul.addr %s157, 8
          %s159 = scalar_lea.vmem [#allocation9], %s158
          %s161 = ssub.s32 128, 128
          %162 = vsyncadd %s156, %s161
          %s163 = smul.addr %s16, 128
          %s164 = scalar_lea.hbm %s1, %s163
          %s166 = sshll.u32 %s159, 4
          %s167 = int_to_ptr.vmem [resolvable:$true] %s166
          %169 = dma.hbm_to_vmem [thread:$0]  %s164, 128, %s167, %s156
        $region24: #{m2fnet_audio_embedding_loss.1} parent=15 // pred_fallthru
          _
        // Predicated region
        $region25: #{m2fnet_audio_embedding_loss.1} parent=15 // pred_check
          %p170 = pneg %p88
        $region26: #{m2fnet_audio_embedding_loss.1} parent=15 // pred_check_branch
          %172 = sbr.rel (%p170) target = $region28
        $region27: #{m2fnet_audio_embedding_loss.1} parent=15 // pred_region
          %s173 = sand.u32 %s16, 1
          %s174 = scalar_lea.sflag [#allocation10], %s173
          %s175 = sand.u32 %s78, 1
          %s176 = smul.addr %s175, 8
          %s177 = scalar_lea.vmem [#allocation11], %s176
          %s179 = ssub.s32 128, 128
          %180 = vsyncadd %s174, %s179
          %s181 = smul.addr %s16, 128
          %s182 = scalar_lea.hbm %s2, %s181
          %s184 = sshll.u32 %s177, 4
          %s185 = int_to_ptr.vmem [resolvable:$true] %s184
          %187 = dma.hbm_to_vmem [thread:$0]  %s182, 128, %s185, %s174
        $region28: #{m2fnet_audio_embedding_loss.1} parent=15 // pred_fallthru
          _
      $region16: #{m2fnet_audio_embedding_loss.1} parent=5 // pred_fallthru
        _
      %p188 = scmp.le.s32.totalorder 1, %s16
      %p189 = scmp.lt.s32.totalorder %s16, 3
      %p190 = pnand %p188, %p189
      %p191 = pneg %p190
      // Predicated region
      $region29: #{m2fnet_audio_embedding_loss.1} parent=5 // pred_check
        _
      $region30: #{m2fnet_audio_embedding_loss.1} parent=5 // pred_check_branch
        %193 = sbr.rel (%p190) target = $region32
      $region31: #{m2fnet_audio_embedding_loss.1} parent=5 // pred_region
        %s194 = ssub.s32 %s16, 1
        %s195 = sand.u32 %s29, 1
        %s196 = scalar_lea.sflag [#allocation7], %s195
        %s197 = sand.u32 %s29, 1
        %s198 = smul.addr %s197, 8
        %s199 = scalar_lea.vmem [#allocation6], %s198
        // Predicated region
        $region33: #{m2fnet_audio_embedding_loss.1} parent=31 // pred_check
          %p200 = pneg %p42
        $region34: #{m2fnet_audio_embedding_loss.1} parent=31 // pred_check_branch
          %202 = sbr.rel (%p200) target = $region36
        $region35: #{m2fnet_audio_embedding_loss.1} parent=31 // pred_region
          %203 = dma.done %s196, 128
        $region36: #{m2fnet_audio_embedding_loss.1} parent=31 // pred_fallthru
          _
        %s204 = sand.u32 %s21, 1
        %s205 = scalar_lea.sflag [#allocation10], %s204
        %s206 = sand.u32 %s55, 1
        %s207 = smul.addr %s206, 8
        %s208 = scalar_lea.vmem [#allocation9], %s207
        // Predicated region
        $region37: #{m2fnet_audio_embedding_loss.1} parent=31 // pred_check
          %p209 = pneg %p68
        $region38: #{m2fnet_audio_embedding_loss.1} parent=31 // pred_check_branch
          %211 = sbr.rel (%p209) target = $region40
        $region39: #{m2fnet_audio_embedding_loss.1} parent=31 // pred_region
          %212 = dma.done %s205, 128
        $region40: #{m2fnet_audio_embedding_loss.1} parent=31 // pred_fallthru
          _
        %s213 = sand.u32 %s21, 1
        %s214 = scalar_lea.sflag [#allocation10], %s213
        %s215 = sand.u32 %s81, 1
        %s216 = smul.addr %s215, 8
        %s217 = scalar_lea.vmem [#allocation11], %s216
        // Predicated region
        $region41: #{m2fnet_audio_embedding_loss.1} parent=31 // pred_check
          %p218 = pneg %p94
        $region42: #{m2fnet_audio_embedding_loss.1} parent=31 // pred_check_branch
          %220 = sbr.rel (%p218) target = $region44
        $region43: #{m2fnet_audio_embedding_loss.1} parent=31 // pred_region
          %221 = dma.done %s214, 128
        $region44: #{m2fnet_audio_embedding_loss.1} parent=31 // pred_fallthru
          _
        %s222 = sand.u32 %s29, 1
        %s223 = scalar_lea.sflag [#allocation7], %s222
        %s224 = sand.u32 %s29, 1
        %s225 = smul.addr %s224, 8
        %s226 = scalar_lea.vmem [#allocation6], %s225
        %p227 = pneg %p42
        %p228 = pneg %p39
        %s229 = sand.u32 %s21, 1
        %s230 = scalar_lea.sflag [#allocation10], %s229
        %s231 = sand.u32 %s55, 1
        %s232 = smul.addr %s231, 8
        %s233 = scalar_lea.vmem [#allocation9], %s232
        %p234 = pneg %p68
        %p235 = pneg %p65
        %s236 = sand.u32 %s21, 1
        %s237 = scalar_lea.sflag [#allocation10], %s236
        %s238 = sand.u32 %s81, 1
        %s239 = smul.addr %s238, 8
        %s240 = scalar_lea.vmem [#allocation11], %s239
        %p241 = pneg %p94
        %p242 = pneg %p91
        %p243 = pneg %p115
        %p244 = pneg %p112
        %p245 = scmp.eq.s32.totalorder %s21, 0
        // Predicated region
        $region45: #{m2fnet_audio_embedding_loss.1} parent=31 // pred_check
          %p246 = pneg %p245
        $region46: #{m2fnet_audio_embedding_loss.1} parent=31 // pred_check_branch
          %248 = sbr.rel (%p246) target = $region48
        $region47: #{m2fnet_audio_embedding_loss.1} parent=31 // pred_region
          %vm249 = vcmask 253952
          %250 = vst.msk [vmem:[#allocation2] sm:$0x1] %vm249, 0.0
          %251 = vst.msk [vmem:[#allocation2 + $0x1] sm:$0x1] %vm249, 0.0
          %252 = vst.msk [vmem:[#allocation2 + $0x2] sm:$0x1] %vm249, 0.0
          %253 = vst.msk [vmem:[#allocation3] sm:$0x1] %vm249, 0.0
          %254 = vst.msk [vmem:[#allocation3 + $0x1] sm:$0x1] %vm249, 0.0
          %255 = vst.msk [vmem:[#allocation3 + $0x2] sm:$0x1] %vm249, 0.0
          %vm256 = vcmask 261120
          %257 = vst.msk [vmem:[#allocation4] sm:$0xff] %vm256, 0.0
          %258 = vst.msk [vmem:[#allocation4 + $0x8] sm:$0xff] %vm256, 0.0
          %259 = vst.msk [vmem:[#allocation4 + $0x10] sm:$0xff] %vm256, 0.0
          %260 = vst.msk [vmem:[#allocation4 + $0x18] sm:$0xff] %vm256, 0.0
          %261 = vst.msk [vmem:[#allocation4 + $0x20] sm:$0xff] %vm256, 0.0
          %262 = vst.msk [vmem:[#allocation4 + $0x28] sm:$0xff] %vm256, 0.0
          %263 = vst.msk [vmem:[#allocation4 + $0x30] sm:$0xff] %vm256, 0.0
          %264 = vst.msk [vmem:[#allocation4 + $0x38] sm:$0xff] %vm256, 0.0
          %265 = vst.msk [vmem:[#allocation4 + $0x40] sm:$0xff] %vm256, 0.0
          %266 = vst.msk [vmem:[#allocation4 + $0x48] sm:$0xff] %vm256, 0.0
          %267 = vst.msk [vmem:[#allocation4 + $0x50] sm:$0xff] %vm256, 0.0
          %268 = vst.msk [vmem:[#allocation4 + $0x58] sm:$0xff] %vm256, 0.0
          %vm269 = vcmask 0
          %270 = vst.msk [vmem:[#allocation5] sm:$0x1] %vm269, 0.0
        $region48: #{m2fnet_audio_embedding_loss.1} parent=31 // pred_fallthru
          _
        %v271 = vld [vmem:[%s199] sm:$0xff]
        %v272 = vld [vmem:[%s208] sm:$0xff]
        %v273 = vld [vmem:[%s217] sm:$0xff]
        %v274 = vmul.f32 %v271, %v271
        %v275 = vmul.f32 %v272, %v272
        %v276 = vmul.f32 %v273, %v273
        %vm277 = vcmask 261120
        %v278 = vsel %vm277, %v274, 0.0
        %279 = vadd.xlane.f32.xlu0 %v278
        %v280 = vpop.xlane.xlu0 %279
        %v281 = vsel %vm277, %v275, 0.0
        %282 = vadd.xlane.f32.xlu0 %v281
        %v283 = vpop.xlane.xlu0 %282
        %v284 = vsel %vm277, %v276, 0.0
        %285 = vadd.xlane.f32.xlu0 %v284
        %v286 = vpop.xlane.xlu0 %285
        %v287 = vmul.f32 %v271, %v272
        %v288 = vsel %vm277, %v287, 0.0
        %289 = vadd.xlane.f32.xlu0 %v288
        %v290 = vpop.xlane.xlu0 %289
        %v291 = vmul.f32 %v271, %v273
        %v292 = vsel %vm277, %v291, 0.0
        %293 = vadd.xlane.f32.xlu0 %v292
        %v294 = vpop.xlane.xlu0 %293
        %v295 = vsub.f32 %v271, %v272
        %v296 = vsub.f32 %v271, %v273
        %v297 = vmul.f32 %v295, %v295
        %v298 = vsel %vm277, %v297, 0.0
        %299 = vadd.xlane.f32.xlu0 %v298
        %v300 = vpop.xlane.xlu0 %299
        %v301 = vrsqrt.pop %v300
        %v302 = vmul.f32 %v300, %v301
        %vm303 = vcmp.eq.f32.partialorder %v300, inf
        %v304 = vsel %vm303, %v300, %v302
        %vm305 = vcmp.eq.f32.partialorder %v300, 0.0
        %v306 = vand.u32 %v300, 2147483648
        %v307 = vsel %vm305, %v306, %v304
        %v308 = vmul.f32 %v296, %v296
        %v309 = vsel %vm277, %v308, 0.0
        %310 = vadd.xlane.f32.xlu0 %v309
        %v311 = vpop.xlane.xlu0 %310
        %v312 = vrsqrt.pop %v311
        %v313 = vmul.f32 %v311, %v312
        %vm314 = vcmp.eq.f32.partialorder %v311, inf
        %v315 = vsel %vm314, %v311, %v313
        %vm316 = vcmp.eq.f32.partialorder %v311, 0.0
        %v317 = vand.u32 %v311, 2147483648
        %v318 = vsel %vm316, %v317, %v315
        %v319 = vrsqrt.pop %v280
        %v320 = vmul.f32 %v280, %v319
        %vm321 = vcmp.eq.f32.partialorder %v280, inf
        %v322 = vsel %vm321, %v280, %v320
        %vm323 = vcmp.eq.f32.partialorder %v280, 0.0
        %v324 = vand.u32 %v280, 2147483648
        %v325 = vsel %vm323, %v324, %v322
        %v326 = vrsqrt.pop %v283
        %v327 = vmul.f32 %v283, %v326
        %vm328 = vcmp.eq.f32.partialorder %v283, inf
        %v329 = vsel %vm328, %v283, %v327
        %vm330 = vcmp.eq.f32.partialorder %v283, 0.0
        %v331 = vand.u32 %v283, 2147483648
        %v332 = vsel %vm330, %v331, %v329
        %v333 = vrsqrt.pop %v286
        %v334 = vmul.f32 %v286, %v333
        %vm335 = vcmp.eq.f32.partialorder %v286, inf
        %v336 = vsel %vm335, %v286, %v334
        %vm337 = vcmp.eq.f32.partialorder %v286, 0.0
        %v338 = vand.u32 %v286, 2147483648
        %v339 = vsel %vm337, %v338, %v336
        %v340 = vmul.f32 %v325, %v332
        %v341 = vadd.f32 %v340, 1e-08
        %v342 = vrcp.pop %v341
        %v343 = vmul.f32 %v290, %v342
        %v344 = vmul.f32 %v325, %v339
        %v345 = vadd.f32 %v344, 1e-08
        %v346 = vrcp.pop %v345
        %v347 = vmul.f32 %v294, %v346
        %v348 = vsub.f32 %v347, %v343
        %v349 = vxor.u32 %v348, 2147483648
        %v350 = vmul.f32 %v349, 1.442695
        %v351 = vpow.pop %v350
        %v352 = vadd.f32 %v351, 1.0
        %v353 = vrcp.pop %v352
        %v354 = vmul.f32 1.0, %v353
        %v355 = vmul.f32 %v354, 2.0
        %v356 = vadd.f32 %v355, 1.0
        %v357 = vsub.f32 %v307, %v318
        %v358 = vadd.f32 %v357, %v356
        %v359 = vmax.f32 %v358, 0.0
        %v360 = vld [vmem:[#allocation5] sm:$0x1]
        %vm361 = vcmask 7168
        %v362 = vsel %vm361, %v359, 0.0
        %363 = vadd.xlane.f32.xlu0 %v362
        %v364 = vpop.xlane.xlu0 %363
        %v365 = vrot.slane %v364, 4
        %v366 = vadd.f32 %v364, %v365
        %v367 = vrot.slane %v366, 2
        %v368 = vadd.f32 %v366, %v367
        %v369 = vrot.slane %v368, 1
        %v370 = vadd.f32 %v368, %v369
        %s371 = vtos %v370
        %v372 = vstv %s371
        %v373 = vadd.f32 %v360, %v372
        %vm374 = vcmask 0
        %375 = vst.msk [vmem:[#allocation5] sm:$0x1] %vm374, %v373
        %v376 = vld [vmem:[#allocation2] sm:$0x1]
        %v377 = vsel %vm277, %v271, 0.0
        %v378 = vrot.slane %v377, 4
        %v379 = vadd.f32 %v377, %v378
        %v380 = vrot.slane %v379, 2
        %v381 = vadd.f32 %v379, %v380
        %v382 = vrot.slane %v381, 1
        %v383 = vadd.f32 %v381, %v382
        %v384 = vadd.f32 %v376, %v383
        %vm385 = vcmask 253952
        %386 = vst.msk [vmem:[#allocation2] sm:$0x1] %vm385, %v384
        %v387 = vld [vmem:[#allocation3] sm:$0x1]
        %v388 = vrot.slane %v278, 4
        %v389 = vadd.f32 %v278, %v388
        %v390 = vrot.slane %v389, 2
        %v391 = vadd.f32 %v389, %v390
        %v392 = vrot.slane %v391, 1
        %v393 = vadd.f32 %v391, %v392
        %v394 = vadd.f32 %v387, %v393
        %395 = vst.msk [vmem:[#allocation3] sm:$0x1] %vm385, %v394
        %v396 = vld [vmem:[%s199] sm:$0xff]
        %v397 = vld [vmem:[#allocation4] sm:$0xff]
        %v398 = vld [vmem:[#allocation4 + $0x8] sm:$0xff]
        %v399 = vld [vmem:[#allocation4 + $0x10] sm:$0xff]
        %v400 = vld [vmem:[#allocation4 + $0x18] sm:$0xff]
        %401 = vxpose.xlu0.b32.start [1/16] %v396, 128
        %402 = vxpose.xlu0.b32.cont [2/16] 0.0, 128
        %403 = vxpose.xlu0.b32.cont [3/16] 0.0, 128
        %404 = vxpose.xlu0.b32.cont [4/16] 0.0, 128
        %405 = vxpose.xlu0.b32.cont [5/16] 0.0, 128
        %406 = vxpose.xlu0.b32.cont [6/16] 0.0, 128
        %407 = vxpose.xlu0.b32.cont [7/16] 0.0, 128
        %408 = vxpose.xlu0.b32.cont [8/16] 0.0, 128
        %409 = vxpose.xlu0.b32.cont [9/16] 0.0, 128
        %410 = vxpose.xlu0.b32.cont [10/16] 0.0, 128
        %411 = vxpose.xlu0.b32.cont [11/16] 0.0, 128
        %412 = vxpose.xlu0.b32.cont [12/16] 0.0, 128
        %413 = vxpose.xlu0.b32.cont [13/16] 0.0, 128
        %414 = vxpose.xlu0.b32.cont [14/16] 0.0, 128
        %415 = vxpose.xlu0.b32.cont [15/16] 0.0, 128
        %416 = vxpose.xlu0.b32.end [16/16] 0.0, 128
        %v417 = vpop.trf.xlu0
        %v418 = vpop.trf.xlu0
        %v419 = vpop.trf.xlu0
        %v420 = vpop.trf.xlu0
        %v421 = vpop.trf.xlu0
        %v422 = vpop.trf.xlu0
        %v423 = vpop.trf.xlu0
        %v424 = vpop.trf.xlu0
        %v425 = vpop.trf.xlu0
        %v426 = vpop.trf.xlu0
        %v427 = vpop.trf.xlu0
        %v428 = vpop.trf.xlu0
        %v429 = vpop.trf.xlu0
        %v430 = vpop.trf.xlu0
        %v431 = vpop.trf.xlu0
        %v432 = vpop.trf.xlu0
        %vm433 = vcmask 64512
        %v435 = vsel %vm433, %v417, 0
        %v438 = vsel %vm433, %v418, 0
        %v441 = vsel %vm433, %v419, 0
        %v444 = vsel %vm433, %v420, 0
        %446 = vmatprep.subr.mxu0 0.0
        %447 = vmatpush1.msra.mxu0 %v396
        %448 = vmatprep.subr.mxu0 0.0
        %449 = vmatpush1.msra.mxu0 0.0
        %450 = vmatprep.subr.mxu0 0.0
        %451 = vmatpush1.msra.mxu0 0.0
        %452 = vmatprep.subr.mxu0 0.0
        %453 = vmatpush1.msra.mxu0 0.0
        %454 = vmatprep.subr.mxu0 0.0
        %455 = vmatpush1.msra.mxu0 0.0
        %456 = vmatprep.subr.mxu0 0.0
        %457 = vmatpush1.msra.mxu0 0.0
        %458 = vmatprep.subr.mxu0 0.0
        %459 = vmatpush1.msra.mxu0 0.0
        %460 = vmatprep.subr.mxu0 0.0
        %461 = vmatpush1.msra.mxu0 0.0
        %462 = vmatprep.subr.mxu0 0.0
        %463 = vmatpush1.msra.mxu0 0.0
        %464 = vmatprep.subr.mxu0 0.0
        %465 = vmatpush1.msra.mxu0 0.0
        %466 = vmatprep.subr.mxu0 0.0
        %467 = vmatpush1.msra.mxu0 0.0
        %468 = vmatprep.subr.mxu0 0.0
        %469 = vmatpush1.msra.mxu0 0.0
        %470 = vmatprep.subr.mxu0 0.0
        %471 = vmatpush1.msra.mxu0 0.0
        %472 = vmatprep.subr.mxu0 0.0
        %473 = vmatpush1.msra.mxu0 0.0
        %474 = vmatprep.subr.mxu0 0.0
        %475 = vmatpush1.msra.mxu0 0.0
        %476 = vmatprep.subr.mxu0 0.0
        %477 = vmatpush1.msra.mxu0 0.0
        %478 = vmatprep.subr.mxu0 0.0
        %479 = vmatpush1.msra.mxu0 0.0
        %480 = vmatprep.subr.mxu0 0.0
        %481 = vmatpush1.msra.mxu0 0.0
        %482 = vmatprep.subr.mxu0 0.0
        %483 = vmatpush1.msra.mxu0 0.0
        %484 = vmatprep.subr.mxu0 0.0
        %485 = vmatpush1.msra.mxu0 0.0
        %486 = vmatprep.subr.mxu0 0.0
        %487 = vmatpush1.msra.mxu0 0.0
        %488 = vmatprep.subr.mxu0 0.0
        %489 = vmatpush1.msra.mxu0 0.0
        %490 = vmatprep.subr.mxu0 0.0
        %491 = vmatpush1.msra.mxu0 0.0
        %492 = vmatprep.subr.mxu0 0.0
        %493 = vmatpush1.msra.mxu0 0.0
        %494 = vmatprep.subr.mxu0 0.0
        %495 = vmatpush1.msra.mxu0 0.0
        %496 = vmatprep.subr.mxu0 0.0
        %497 = vmatpush1.msra.mxu0 0.0
        %498 = vmatprep.subr.mxu0 0.0
        %499 = vmatpush1.msra.mxu0 0.0
        %500 = vmatprep.subr.mxu0 0.0
        %501 = vmatpush1.msra.mxu0 0.0
        %502 = vmatprep.subr.mxu0 0.0
        %503 = vmatpush1.msra.mxu0 0.0
        %504 = vmatprep.subr.mxu0 0.0
        %505 = vmatpush1.msra.mxu0 0.0
        %506 = vmatprep.subr.mxu0 0.0
        %507 = vmatpush1.msra.mxu0 0.0
        %508 = vmatprep.subr.mxu0 0.0
        %509 = vmatpush1.msra.mxu0 0.0
        %510 = vmatprep.mubr.f32.mxu0 0.0
        %511 = vmatmul.mubr.f32.gmra.mrb[0].mxu0 %v435
        %v512 = vpop.f32.mrb[0].mxu0
        %v513 = vadd.f32 0.0, %v512
        %v514 = vpop.f32.mrb[0].mxu0
        %515 = vmatprep.mubr.f32.mxu0 0.0
        %516 = vmatmul.mubr.f32.gmra.mrb[0].mxu0 %v438
        %v517 = vpop.f32.mrb[0].mxu0
        %v518 = vadd.f32 0.0, %v517
        %v519 = vpop.f32.mrb[0].mxu0
        %520 = vmatprep.mubr.f32.mxu0 0.0
        %521 = vmatmul.mubr.f32.gmra.mrb[0].mxu0 %v441
        %v522 = vpop.f32.mrb[0].mxu0
        %v523 = vadd.f32 0.0, %v522
        %v524 = vpop.f32.mrb[0].mxu0
        %525 = vmatprep.mubr.f32.mxu0 0.0
        %526 = vmatmul.mubr.f32.gmra.mrb[0].mxu0 %v444
        %v527 = vpop.f32.mrb[0].mxu0
        %v528 = vadd.f32 0.0, %v527
        %v529 = vpop.f32.mrb[0].mxu0
        %530 = vdwg.mxu0
        %v531 = vadd.f32 %v397, %v513
        %v532 = vadd.f32 %v398, %v518
        %v533 = vadd.f32 %v399, %v523
        %v534 = vadd.f32 %v400, %v528
        %535 = vst.msk [vmem:[#allocation4] sm:$0xff] %vm277, %v531
        %536 = vst.msk [vmem:[#allocation4 + $0x8] sm:$0xff] %vm277, %v532
        %537 = vst.msk [vmem:[#allocation4 + $0x10] sm:$0xff] %vm277, %v533
        %538 = vst.msk [vmem:[#allocation4 + $0x18] sm:$0xff] %vm277, %v534
        %s539 = scalar_lea.vmem [#allocation2], 1
        %v540 = vld [vmem:[%s539] sm:$0x1]
        %v541 = vsel %vm277, %v272, 0.0
        %v542 = vrot.slane %v541, 4
        %v543 = vadd.f32 %v541, %v542
        %v544 = vrot.slane %v543, 2
        %v545 = vadd.f32 %v543, %v544
        %v546 = vrot.slane %v545, 1
        %v547 = vadd.f32 %v545, %v546
        %v548 = vadd.f32 %v540, %v547
        %549 = vst.msk [vmem:[%s539] sm:$0x1] %vm385, %v548
        %s550 = scalar_lea.vmem [#allocation3], 1
        %v551 = vld [vmem:[%s550] sm:$0x1]
        %v552 = vrot.slane %v281, 4
        %v553 = vadd.f32 %v281, %v552
        %v554 = vrot.slane %v553, 2
        %v555 = vadd.f32 %v553, %v554
        %v556 = vrot.slane %v555, 1
        %v557 = vadd.f32 %v555, %v556
        %v558 = vadd.f32 %v551, %v557
        %559 = vst.msk [vmem:[%s550] sm:$0x1] %vm385, %v558
        %v560 = vld [vmem:[%s208] sm:$0xff]
        %s561 = scalar_lea.vmem [#allocation4], 32
        %v562 = vld [vmem:[%s561] sm:$0xff]
        %v563 = vld [vmem:[%s561 + $0x8] sm:$0xff]
        %v564 = vld [vmem:[%s561 + $0x10] sm:$0xff]
        %v565 = vld [vmem:[%s561 + $0x18] sm:$0xff]
        %566 = vxpose.xlu0.b32.start [1/16] %v560, 128
        %567 = vxpose.xlu0.b32.cont [2/16] 0.0, 128
        %568 = vxpose.xlu0.b32.cont [3/16] 0.0, 128
        %569 = vxpose.xlu0.b32.cont [4/16] 0.0, 128
        %570 = vxpose.xlu0.b32.cont [5/16] 0.0, 128
        %571 = vxpose.xlu0.b32.cont [6/16] 0.0, 128
        %572 = vxpose.xlu0.b32.cont [7/16] 0.0, 128
        %573 = vxpose.xlu0.b32.cont [8/16] 0.0, 128
        %574 = vxpose.xlu0.b32.cont [9/16] 0.0, 128
        %575 = vxpose.xlu0.b32.cont [10/16] 0.0, 128
        %576 = vxpose.xlu0.b32.cont [11/16] 0.0, 128
        %577 = vxpose.xlu0.b32.cont [12/16] 0.0, 128
        %578 = vxpose.xlu0.b32.cont [13/16] 0.0, 128
        %579 = vxpose.xlu0.b32.cont [14/16] 0.0, 128
        %580 = vxpose.xlu0.b32.cont [15/16] 0.0, 128
        %581 = vxpose.xlu0.b32.end [16/16] 0.0, 128
        %v582 = vpop.trf.xlu0
        %v583 = vpop.trf.xlu0
        %v584 = vpop.trf.xlu0
        %v585 = vpop.trf.xlu0
        %v586 = vpop.trf.xlu0
        %v587 = vpop.trf.xlu0
        %v588 = vpop.trf.xlu0
        %v589 = vpop.trf.xlu0
        %v590 = vpop.trf.xlu0
        %v591 = vpop.trf.xlu0
        %v592 = vpop.trf.xlu0
        %v593 = vpop.trf.xlu0
        %v594 = vpop.trf.xlu0
        %v595 = vpop.trf.xlu0
        %v596 = vpop.trf.xlu0
        %v597 = vpop.trf.xlu0
        %v599 = vsel %vm433, %v582, 0
        %v602 = vsel %vm433, %v583, 0
        %v605 = vsel %vm433, %v584, 0
        %v608 = vsel %vm433, %v585, 0
        %610 = vmatprep.subr.mxu0 0.0
        %611 = vmatpush1.msra.mxu0 %v560
        %612 = vmatprep.subr.mxu0 0.0
        %613 = vmatpush1.msra.mxu0 0.0
        %614 = vmatprep.subr.mxu0 0.0
        %615 = vmatpush1.msra.mxu0 0.0
        %616 = vmatprep.subr.mxu0 0.0
        %617 = vmatpush1.msra.mxu0 0.0
        %618 = vmatprep.subr.mxu0 0.0
        %619 = vmatpush1.msra.mxu0 0.0
        %620 = vmatprep.subr.mxu0 0.0
        %621 = vmatpush1.msra.mxu0 0.0
        %622 = vmatprep.subr.mxu0 0.0
        %623 = vmatpush1.msra.mxu0 0.0
        %624 = vmatprep.subr.mxu0 0.0
        %625 = vmatpush1.msra.mxu0 0.0
        %626 = vmatprep.subr.mxu0 0.0
        %627 = vmatpush1.msra.mxu0 0.0
        %628 = vmatprep.subr.mxu0 0.0
        %629 = vmatpush1.msra.mxu0 0.0
        %630 = vmatprep.subr.mxu0 0.0
        %631 = vmatpush1.msra.mxu0 0.0
        %632 = vmatprep.subr.mxu0 0.0
        %633 = vmatpush1.msra.mxu0 0.0
        %634 = vmatprep.subr.mxu0 0.0
        %635 = vmatpush1.msra.mxu0 0.0
        %636 = vmatprep.subr.mxu0 0.0
        %637 = vmatpush1.msra.mxu0 0.0
        %638 = vmatprep.subr.mxu0 0.0
        %639 = vmatpush1.msra.mxu0 0.0
        %640 = vmatprep.subr.mxu0 0.0
        %641 = vmatpush1.msra.mxu0 0.0
        %642 = vmatprep.subr.mxu0 0.0
        %643 = vmatpush1.msra.mxu0 0.0
        %644 = vmatprep.subr.mxu0 0.0
        %645 = vmatpush1.msra.mxu0 0.0
        %646 = vmatprep.subr.mxu0 0.0
        %647 = vmatpush1.msra.mxu0 0.0
        %648 = vmatprep.subr.mxu0 0.0
        %649 = vmatpush1.msra.mxu0 0.0
        %650 = vmatprep.subr.mxu0 0.0
        %651 = vmatpush1.msra.mxu0 0.0
        %652 = vmatprep.subr.mxu0 0.0
        %653 = vmatpush1.msra.mxu0 0.0
        %654 = vmatprep.subr.mxu0 0.0
        %655 = vmatpush1.msra.mxu0 0.0
        %656 = vmatprep.subr.mxu0 0.0
        %657 = vmatpush1.msra.mxu0 0.0
        %658 = vmatprep.subr.mxu0 0.0
        %659 = vmatpush1.msra.mxu0 0.0
        %660 = vmatprep.subr.mxu0 0.0
        %661 = vmatpush1.msra.mxu0 0.0
        %662 = vmatprep.subr.mxu0 0.0
        %663 = vmatpush1.msra.mxu0 0.0
        %664 = vmatprep.subr.mxu0 0.0
        %665 = vmatpush1.msra.mxu0 0.0
        %666 = vmatprep.subr.mxu0 0.0
        %667 = vmatpush1.msra.mxu0 0.0
        %668 = vmatprep.subr.mxu0 0.0
        %669 = vmatpush1.msra.mxu0 0.0
        %670 = vmatprep.subr.mxu0 0.0
        %671 = vmatpush1.msra.mxu0 0.0
        %672 = vmatprep.subr.mxu0 0.0
        %673 = vmatpush1.msra.mxu0 0.0
        %674 = vmatprep.mubr.f32.mxu0 0.0
        %675 = vmatmul.mubr.f32.gmra.mrb[0].mxu0 %v599
        %v676 = vpop.f32.mrb[0].mxu0
        %v677 = vadd.f32 0.0, %v676
        %v678 = vpop.f32.mrb[0].mxu0
        %679 = vmatprep.mubr.f32.mxu0 0.0
        %680 = vmatmul.mubr.f32.gmra.mrb[0].mxu0 %v602
        %v681 = vpop.f32.mrb[0].mxu0
        %v682 = vadd.f32 0.0, %v681
        %v683 = vpop.f32.mrb[0].mxu0
        %684 = vmatprep.mubr.f32.mxu0 0.0
        %685 = vmatmul.mubr.f32.gmra.mrb[0].mxu0 %v605
        %v686 = vpop.f32.mrb[0].mxu0
        %v687 = vadd.f32 0.0, %v686
        %v688 = vpop.f32.mrb[0].mxu0
        %689 = vmatprep.mubr.f32.mxu0 0.0
        %690 = vmatmul.mubr.f32.gmra.mrb[0].mxu0 %v608
        %v691 = vpop.f32.mrb[0].mxu0
        %v692 = vadd.f32 0.0, %v691
        %v693 = vpop.f32.mrb[0].mxu0
        %694 = vdwg.mxu0
        %v695 = vadd.f32 %v562, %v677
        %v696 = vadd.f32 %v563, %v682
        %v697 = vadd.f32 %v564, %v687
        %v698 = vadd.f32 %v565, %v692
        %699 = vst.msk [vmem:[%s561] sm:$0xff] %vm277, %v695
        %700 = vst.msk [vmem:[%s561 + $0x8] sm:$0xff] %vm277, %v696
        %701 = vst.msk [vmem:[%s561 + $0x10] sm:$0xff] %vm277, %v697
        %702 = vst.msk [vmem:[%s561 + $0x18] sm:$0xff] %vm277, %v698
        %s703 = scalar_lea.vmem [#allocation2], 2
        %v704 = vld [vmem:[%s703] sm:$0x1]
        %v705 = vsel %vm277, %v273, 0.0
        %v706 = vrot.slane %v705, 4
        %v707 = vadd.f32 %v705, %v706
        %v708 = vrot.slane %v707, 2
        %v709 = vadd.f32 %v707, %v708
        %v710 = vrot.slane %v709, 1
        %v711 = vadd.f32 %v709, %v710
        %v712 = vadd.f32 %v704, %v711
        %713 = vst.msk [vmem:[%s703] sm:$0x1] %vm385, %v712
        %s714 = scalar_lea.vmem [#allocation3], 2
        %v715 = vld [vmem:[%s714] sm:$0x1]
        %v716 = vrot.slane %v284, 4
        %v717 = vadd.f32 %v284, %v716
        %v718 = vrot.slane %v717, 2
        %v719 = vadd.f32 %v717, %v718
        %v720 = vrot.slane %v719, 1
        %v721 = vadd.f32 %v719, %v720
        %v722 = vadd.f32 %v715, %v721
        %723 = vst.msk [vmem:[%s714] sm:$0x1] %vm385, %v722
        %v724 = vld [vmem:[%s217] sm:$0xff]
        %s725 = scalar_lea.vmem [#allocation4], 64
        %v726 = vld [vmem:[%s725] sm:$0xff]
        %v727 = vld [vmem:[%s725 + $0x8] sm:$0xff]
        %v728 = vld [vmem:[%s725 + $0x10] sm:$0xff]
        %v729 = vld [vmem:[%s725 + $0x18] sm:$0xff]
        %730 = vxpose.xlu0.b32.start [1/16] %v724, 128
        %731 = vxpose.xlu0.b32.cont [2/16] 0.0, 128
        %732 = vxpose.xlu0.b32.cont [3/16] 0.0, 128
        %733 = vxpose.xlu0.b32.cont [4/16] 0.0, 128
        %734 = vxpose.xlu0.b32.cont [5/16] 0.0, 128
        %735 = vxpose.xlu0.b32.cont [6/16] 0.0, 128
        %736 = vxpose.xlu0.b32.cont [7/16] 0.0, 128
        %737 = vxpose.xlu0.b32.cont [8/16] 0.0, 128
        %738 = vxpose.xlu0.b32.cont [9/16] 0.0, 128
        %739 = vxpose.xlu0.b32.cont [10/16] 0.0, 128
        %740 = vxpose.xlu0.b32.cont [11/16] 0.0, 128
        %741 = vxpose.xlu0.b32.cont [12/16] 0.0, 128
        %742 = vxpose.xlu0.b32.cont [13/16] 0.0, 128
        %743 = vxpose.xlu0.b32.cont [14/16] 0.0, 128
        %744 = vxpose.xlu0.b32.cont [15/16] 0.0, 128
        %745 = vxpose.xlu0.b32.end [16/16] 0.0, 128
        %v746 = vpop.trf.xlu0
        %v747 = vpop.trf.xlu0
        %v748 = vpop.trf.xlu0
        %v749 = vpop.trf.xlu0
        %v750 = vpop.trf.xlu0
        %v751 = vpop.trf.xlu0
        %v752 = vpop.trf.xlu0
        %v753 = vpop.trf.xlu0
        %v754 = vpop.trf.xlu0
        %v755 = vpop.trf.xlu0
        %v756 = vpop.trf.xlu0
        %v757 = vpop.trf.xlu0
        %v758 = vpop.trf.xlu0
        %v759 = vpop.trf.xlu0
        %v760 = vpop.trf.xlu0
        %v761 = vpop.trf.xlu0
        %v763 = vsel %vm433, %v746, 0
        %v766 = vsel %vm433, %v747, 0
        %v769 = vsel %vm433, %v748, 0
        %v772 = vsel %vm433, %v749, 0
        %774 = vmatprep.subr.mxu0 0.0
        %775 = vmatpush1.msra.mxu0 %v724
        %776 = vmatprep.subr.mxu0 0.0
        %777 = vmatpush1.msra.mxu0 0.0
        %778 = vmatprep.subr.mxu0 0.0
        %779 = vmatpush1.msra.mxu0 0.0
        %780 = vmatprep.subr.mxu0 0.0
        %781 = vmatpush1.msra.mxu0 0.0
        %782 = vmatprep.subr.mxu0 0.0
        %783 = vmatpush1.msra.mxu0 0.0
        %784 = vmatprep.subr.mxu0 0.0
        %785 = vmatpush1.msra.mxu0 0.0
        %786 = vmatprep.subr.mxu0 0.0
        %787 = vmatpush1.msra.mxu0 0.0
        %788 = vmatprep.subr.mxu0 0.0
        %789 = vmatpush1.msra.mxu0 0.0
        %790 = vmatprep.subr.mxu0 0.0
        %791 = vmatpush1.msra.mxu0 0.0
        %792 = vmatprep.subr.mxu0 0.0
        %793 = vmatpush1.msra.mxu0 0.0
        %794 = vmatprep.subr.mxu0 0.0
        %795 = vmatpush1.msra.mxu0 0.0
        %796 = vmatprep.subr.mxu0 0.0
        %797 = vmatpush1.msra.mxu0 0.0
        %798 = vmatprep.subr.mxu0 0.0
        %799 = vmatpush1.msra.mxu0 0.0
        %800 = vmatprep.subr.mxu0 0.0
        %801 = vmatpush1.msra.mxu0 0.0
        %802 = vmatprep.subr.mxu0 0.0
        %803 = vmatpush1.msra.mxu0 0.0
        %804 = vmatprep.subr.mxu0 0.0
        %805 = vmatpush1.msra.mxu0 0.0
        %806 = vmatprep.subr.mxu0 0.0
        %807 = vmatpush1.msra.mxu0 0.0
        %808 = vmatprep.subr.mxu0 0.0
        %809 = vmatpush1.msra.mxu0 0.0
        %810 = vmatprep.subr.mxu0 0.0
        %811 = vmatpush1.msra.mxu0 0.0
        %812 = vmatprep.subr.mxu0 0.0
        %813 = vmatpush1.msra.mxu0 0.0
        %814 = vmatprep.subr.mxu0 0.0
        %815 = vmatpush1.msra.mxu0 0.0
        %816 = vmatprep.subr.mxu0 0.0
        %817 = vmatpush1.msra.mxu0 0.0
        %818 = vmatprep.subr.mxu0 0.0
        %819 = vmatpush1.msra.mxu0 0.0
        %820 = vmatprep.subr.mxu0 0.0
        %821 = vmatpush1.msra.mxu0 0.0
        %822 = vmatprep.subr.mxu0 0.0
        %823 = vmatpush1.msra.mxu0 0.0
        %824 = vmatprep.subr.mxu0 0.0
        %825 = vmatpush1.msra.mxu0 0.0
        %826 = vmatprep.subr.mxu0 0.0
        %827 = vmatpush1.msra.mxu0 0.0
        %828 = vmatprep.subr.mxu0 0.0
        %829 = vmatpush1.msra.mxu0 0.0
        %830 = vmatprep.subr.mxu0 0.0
        %831 = vmatpush1.msra.mxu0 0.0
        %832 = vmatprep.subr.mxu0 0.0
        %833 = vmatpush1.msra.mxu0 0.0
        %834 = vmatprep.subr.mxu0 0.0
        %835 = vmatpush1.msra.mxu0 0.0
        %836 = vmatprep.subr.mxu0 0.0
        %837 = vmatpush1.msra.mxu0 0.0
        %838 = vmatprep.mubr.f32.mxu0 0.0
        %839 = vmatmul.mubr.f32.gmra.mrb[0].mxu0 %v763
        %v840 = vpop.f32.mrb[0].mxu0
        %v841 = vadd.f32 0.0, %v840
        %v842 = vpop.f32.mrb[0].mxu0
        %843 = vmatprep.mubr.f32.mxu0 0.0
        %844 = vmatmul.mubr.f32.gmra.mrb[0].mxu0 %v766
        %v845 = vpop.f32.mrb[0].mxu0
        %v846 = vadd.f32 0.0, %v845
        %v847 = vpop.f32.mrb[0].mxu0
        %848 = vmatprep.mubr.f32.mxu0 0.0
        %849 = vmatmul.mubr.f32.gmra.mrb[0].mxu0 %v769
        %v850 = vpop.f32.mrb[0].mxu0
        %v851 = vadd.f32 0.0, %v850
        %v852 = vpop.f32.mrb[0].mxu0
        %853 = vmatprep.mubr.f32.mxu0 0.0
        %854 = vmatmul.mubr.f32.gmra.mrb[0].mxu0 %v772
        %v855 = vpop.f32.mrb[0].mxu0
        %v856 = vadd.f32 0.0, %v855
        %v857 = vpop.f32.mrb[0].mxu0
        %858 = vdwg.mxu0
        %v859 = vadd.f32 %v726, %v841
        %v860 = vadd.f32 %v727, %v846
        %v861 = vadd.f32 %v728, %v851
        %v862 = vadd.f32 %v729, %v856
        %863 = vst.msk [vmem:[%s725] sm:$0xff] %vm277, %v859
        %864 = vst.msk [vmem:[%s725 + $0x8] sm:$0xff] %vm277, %v860
        %865 = vst.msk [vmem:[%s725 + $0x10] sm:$0xff] %vm277, %v861
        %866 = vst.msk [vmem:[%s725 + $0x18] sm:$0xff] %vm277, %v862
        %p867 = scmp.eq.s32.totalorder %s21, 1
        // Predicated region
        $region49: #{m2fnet_audio_embedding_loss.1} parent=31 // pred_check
          %p868 = pneg %p867
        $region50: #{m2fnet_audio_embedding_loss.1} parent=31 // pred_check_branch
          %870 = sbr.rel (%p868) target = $region52
        $region51: #{m2fnet_audio_embedding_loss.1} parent=31 // pred_region
          %v871 = vld [vmem:[#allocation2] sm:$0x1]
          %v872 = vmul.f32 %v871, 0.0625
          %v873 = vld [vmem:[#allocation3] sm:$0x1]
          %v874 = vmul.f32 %v872, 16.0
          %v875 = vmul.f32 %v874, %v872
          %v876 = vsub.f32 %v873, %v875
          %v877 = vmul.f32 %v876, 0.06666667
          %v878 = vmax.f32 %v877, 0.0
          %v879 = vadd.f32 %v878, 0.0001
          %v880 = vrsqrt.pop %v879
          %v881 = vmul.f32 %v879, %v880
          %vm882 = vcmp.eq.f32.partialorder %v879, inf
          %v883 = vsel %vm882, %v879, %v881
          %vm884 = vcmp.eq.f32.partialorder %v879, 0.0
          %v885 = vand.u32 %v879, 2147483648
          %v886 = vsel %vm884, %v885, %v883
          %v887 = vsub.f32 1.0, %v886
          %v888 = vmax.f32 %v887, 0.0
          %v889 = vsel %vm385, %v888, 0.0
          %890 = vadd.xlane.f32.xlu0 %v889
          %v891 = vpop.xlane.xlu0 %890
          %v892 = vrot.slane %v891, 4
          %v893 = vadd.f32 %v891, %v892
          %v894 = vrot.slane %v893, 2
          %v895 = vadd.f32 %v893, %v894
          %v896 = vrot.slane %v895, 1
          %v897 = vadd.f32 %v895, %v896
          %s898 = vtos %v897
          %s899 = sadd.f32 %s898, 0.0
          %v900 = vmul.f32 %v877, %v877
          %v901 = vsel %vm385, %v900, 0.0
          %902 = vadd.xlane.f32.xlu0 %v901
          %v903 = vpop.xlane.xlu0 %902
          %v904 = vrot.slane %v903, 4
          %v905 = vadd.f32 %v903, %v904
          %v906 = vrot.slane %v905, 2
          %v907 = vadd.f32 %v905, %v906
          %v908 = vrot.slane %v907, 1
          %v909 = vadd.f32 %v907, %v908
          %s910 = vtos %v909
          %s911 = sadd.f32 %s910, 0.0
          %v912 = vld [vmem:[#allocation4] sm:$0xff]
          %v913 = vld [vmem:[#allocation4 + $0x8] sm:$0xff]
          %v914 = vld [vmem:[#allocation4 + $0x10] sm:$0xff]
          %v915 = vld [vmem:[#allocation4 + $0x18] sm:$0xff]
          %v916 = vmul.f32 %v912, %v912
          %v917 = vmul.f32 %v913, %v913
          %v918 = vmul.f32 %v914, %v914
          %v919 = vmul.f32 %v915, %v915
          %v920 = vsel %vm277, %v916, 0.0
          %v921 = vsel %vm277, %v917, 0.0
          %v922 = vadd.f32 %v920, %v921
          %v923 = vsel %vm277, %v918, 0.0
          %v924 = vadd.f32 %v922, %v923
          %v925 = vsel %vm277, %v919, 0.0
          %v926 = vadd.f32 %v924, %v925
          %927 = vadd.xlane.f32.xlu0 %v926
          %v928 = vpop.xlane.xlu0 %927
          %v929 = vrot.slane %v928, 4
          %v930 = vadd.f32 %v928, %v929
          %v931 = vrot.slane %v930, 2
          %v932 = vadd.f32 %v930, %v931
          %v933 = vrot.slane %v932, 1
          %v934 = vadd.f32 %v932, %v933
          %s935 = vtos %v934
          %v937 = vsel %vm277, %v872, 0
          %939 = vmatprep.subr.mxu0 0.0
          %940 = vmatpush1.msra.mxu0 %v912
          %941 = vmatprep.subr.mxu0 0.0
          %942 = vmatpush1.msra.mxu0 %v913
          %943 = vmatprep.subr.mxu0 0.0
          %944 = vmatpush1.msra.mxu0 %v914
          %945 = vmatprep.subr.mxu0 0.0
          %946 = vmatpush1.msra.mxu0 %v915
          %947 = vmatprep.subr.mxu0 0.0
          %948 = vmatpush1.msra.mxu0 0.0
          %949 = vmatprep.subr.mxu0 0.0
          %950 = vmatpush1.msra.mxu0 0.0
          %951 = vmatprep.subr.mxu0 0.0
          %952 = vmatpush1.msra.mxu0 0.0
          %953 = vmatprep.subr.mxu0 0.0
          %954 = vmatpush1.msra.mxu0 0.0
          %955 = vmatprep.subr.mxu0 0.0
          %956 = vmatpush1.msra.mxu0 0.0
          %957 = vmatprep.subr.mxu0 0.0
          %958 = vmatpush1.msra.mxu0 0.0
          %959 = vmatprep.subr.mxu0 0.0
          %960 = vmatpush1.msra.mxu0 0.0
          %961 = vmatprep.subr.mxu0 0.0
          %962 = vmatpush1.msra.mxu0 0.0
          %963 = vmatprep.subr.mxu0 0.0
          %964 = vmatpush1.msra.mxu0 0.0
          %965 = vmatprep.subr.mxu0 0.0
          %966 = vmatpush1.msra.mxu0 0.0
          %967 = vmatprep.subr.mxu0 0.0
          %968 = vmatpush1.msra.mxu0 0.0
          %969 = vmatprep.subr.mxu0 0.0
          %970 = vmatpush1.msra.mxu0 0.0
          %971 = vmatprep.subr.mxu0 0.0
          %972 = vmatpush1.msra.mxu0 0.0
          %973 = vmatprep.subr.mxu0 0.0
          %974 = vmatpush1.msra.mxu0 0.0
          %975 = vmatprep.subr.mxu0 0.0
          %976 = vmatpush1.msra.mxu0 0.0
          %977 = vmatprep.subr.mxu0 0.0
          %978 = vmatpush1.msra.mxu0 0.0
          %979 = vmatprep.subr.mxu0 0.0
          %980 = vmatpush1.msra.mxu0 0.0
          %981 = vmatprep.subr.mxu0 0.0
          %982 = vmatpush1.msra.mxu0 0.0
          %983 = vmatprep.subr.mxu0 0.0
          %984 = vmatpush1.msra.mxu0 0.0
          %985 = vmatprep.subr.mxu0 0.0
          %986 = vmatpush1.msra.mxu0 0.0
          %987 = vmatprep.subr.mxu0 0.0
          %988 = vmatpush1.msra.mxu0 0.0
          %989 = vmatprep.subr.mxu0 0.0
          %990 = vmatpush1.msra.mxu0 0.0
          %991 = vmatprep.subr.mxu0 0.0
          %992 = vmatpush1.msra.mxu0 0.0
          %993 = vmatprep.subr.mxu0 0.0
          %994 = vmatpush1.msra.mxu0 0.0
          %995 = vmatprep.subr.mxu0 0.0
          %996 = vmatpush1.msra.mxu0 0.0
          %997 = vmatprep.subr.mxu0 0.0
          %998 = vmatpush1.msra.mxu0 0.0
          %999 = vmatprep.subr.mxu0 0.0
          %1000 = vmatpush1.msra.mxu0 0.0
          %1001 = vmatprep.subr.mxu0 0.0
          %1002 = vmatpush1.msra.mxu0 0.0
          %1003 = vmatprep.mubr.f32.mxu0 0.0
          %1004 = vmatmul.mubr.f32.gmra.mrb[0].mxu0 %v937
          %v1005 = vpop.f32.mrb[0].mxu0
          %v1006 = vadd.f32 0.0, %v1005
          %v1007 = vpop.f32.mrb[0].mxu0
          %1008 = vdwg.mxu0
          %v1009 = vmul.f32 %v1006, %v872
          %v1010 = vsel %vm385, %v1009, 0.0
          %1011 = vadd.xlane.f32.xlu0 %v1010
          %v1012 = vpop.xlane.xlu0 %1011
          %v1013 = vrot.slane %v1012, 4
          %v1014 = vadd.f32 %v1012, %v1013
          %v1015 = vrot.slane %v1014, 2
          %v1016 = vadd.f32 %v1014, %v1015
          %v1017 = vrot.slane %v1016, 1
          %v1018 = vadd.f32 %v1016, %v1017
          %s1019 = vtos %v1018
          %v1020 = vmul.f32 %v872, %v872
          %v1021 = vsel %vm385, %v1020, 0.0
          %1022 = vadd.xlane.f32.xlu0 %v1021
          %v1023 = vpop.xlane.xlu0 %1022
          %v1024 = vrot.slane %v1023, 4
          %v1025 = vadd.f32 %v1023, %v1024
          %v1026 = vrot.slane %v1025, 2
          %v1027 = vadd.f32 %v1025, %v1026
          %v1028 = vrot.slane %v1027, 1
          %v1029 = vadd.f32 %v1027, %v1028
          %s1030 = vtos %v1029
          %s1031 = smul.f32 %s1019, 32.0
          %s1032 = ssub.f32 %s935, %s1031
          %s1033 = smul.f32 %s1030, 256.0
          %s1034 = smul.f32 %s1033, %s1030
          %s1035 = sadd.f32 %s1032, %s1034
          %s1036 = smul.f32 %s1035, 0.0044444446
          %s1037 = sadd.f32 %s1036, 0.0
          %v1038 = vld [vmem:[%s539] sm:$0x1]
          %v1039 = vmul.f32 %v1038, 0.0625
          %v1040 = vld [vmem:[%s550] sm:$0x1]
          %v1041 = vmul.f32 %v1039, 16.0
          %v1042 = vmul.f32 %v1041, %v1039
          %v1043 = vsub.f32 %v1040, %v1042
          %v1044 = vmul.f32 %v1043, 0.06666667
          %v1045 = vmax.f32 %v1044, 0.0
          %v1046 = vadd.f32 %v1045, 0.0001
          %v1047 = vrsqrt.pop %v1046
          %v1048 = vmul.f32 %v1046, %v1047
          %vm1049 = vcmp.eq.f32.partialorder %v1046, inf
          %v1050 = vsel %vm1049, %v1046, %v1048
          %vm1051 = vcmp.eq.f32.partialorder %v1046, 0.0
          %v1052 = vand.u32 %v1046, 2147483648
          %v1053 = vsel %vm1051, %v1052, %v1050
          %v1054 = vsub.f32 1.0, %v1053
          %v1055 = vmax.f32 %v1054, 0.0
          %v1056 = vsel %vm385, %v1055, 0.0
          %1057 = vadd.xlane.f32.xlu0 %v1056
          %v1058 = vpop.xlane.xlu0 %1057
          %v1059 = vrot.slane %v1058, 4
          %v1060 = vadd.f32 %v1058, %v1059
          %v1061 = vrot.slane %v1060, 2
          %v1062 = vadd.f32 %v1060, %v1061
          %v1063 = vrot.slane %v1062, 1
          %v1064 = vadd.f32 %v1062, %v1063
          %s1065 = vtos %v1064
          %s1066 = sadd.f32 %s899, %s1065
          %v1067 = vmul.f32 %v1044, %v1044
          %v1068 = vsel %vm385, %v1067, 0.0
          %1069 = vadd.xlane.f32.xlu0 %v1068
          %v1070 = vpop.xlane.xlu0 %1069
          %v1071 = vrot.slane %v1070, 4
          %v1072 = vadd.f32 %v1070, %v1071
          %v1073 = vrot.slane %v1072, 2
          %v1074 = vadd.f32 %v1072, %v1073
          %v1075 = vrot.slane %v1074, 1
          %v1076 = vadd.f32 %v1074, %v1075
          %s1077 = vtos %v1076
          %s1078 = sadd.f32 %s911, %s1077
          %v1079 = vld [vmem:[%s561] sm:$0xff]
          %v1080 = vld [vmem:[%s561 + $0x8] sm:$0xff]
          %v1081 = vld [vmem:[%s561 + $0x10] sm:$0xff]
          %v1082 = vld [vmem:[%s561 + $0x18] sm:$0xff]
          %v1083 = vmul.f32 %v1079, %v1079
          %v1084 = vmul.f32 %v1080, %v1080
          %v1085 = vmul.f32 %v1081, %v1081
          %v1086 = vmul.f32 %v1082, %v1082
          %v1087 = vsel %vm277, %v1083, 0.0
          %v1088 = vsel %vm277, %v1084, 0.0
          %v1089 = vadd.f32 %v1087, %v1088
          %v1090 = vsel %vm277, %v1085, 0.0
          %v1091 = vadd.f32 %v1089, %v1090
          %v1092 = vsel %vm277, %v1086, 0.0
          %v1093 = vadd.f32 %v1091, %v1092
          %1094 = vadd.xlane.f32.xlu0 %v1093
          %v1095 = vpop.xlane.xlu0 %1094
          %v1096 = vrot.slane %v1095, 4
          %v1097 = vadd.f32 %v1095, %v1096
          %v1098 = vrot.slane %v1097, 2
          %v1099 = vadd.f32 %v1097, %v1098
          %v1100 = vrot.slane %v1099, 1
          %v1101 = vadd.f32 %v1099, %v1100
          %s1102 = vtos %v1101
          %v1104 = vsel %vm277, %v1039, 0
          %1106 = vmatprep.subr.mxu0 0.0
          %1107 = vmatpush1.msra.mxu0 %v1079
          %1108 = vmatprep.subr.mxu0 0.0
          %1109 = vmatpush1.msra.mxu0 %v1080
          %1110 = vmatprep.subr.mxu0 0.0
          %1111 = vmatpush1.msra.mxu0 %v1081
          %1112 = vmatprep.subr.mxu0 0.0
          %1113 = vmatpush1.msra.mxu0 %v1082
          %1114 = vmatprep.subr.mxu0 0.0
          %1115 = vmatpush1.msra.mxu0 0.0
          %1116 = vmatprep.subr.mxu0 0.0
          %1117 = vmatpush1.msra.mxu0 0.0
          %1118 = vmatprep.subr.mxu0 0.0
          %1119 = vmatpush1.msra.mxu0 0.0
          %1120 = vmatprep.subr.mxu0 0.0
          %1121 = vmatpush1.msra.mxu0 0.0
          %1122 = vmatprep.subr.mxu0 0.0
          %1123 = vmatpush1.msra.mxu0 0.0
          %1124 = vmatprep.subr.mxu0 0.0
          %1125 = vmatpush1.msra.mxu0 0.0
          %1126 = vmatprep.subr.mxu0 0.0
          %1127 = vmatpush1.msra.mxu0 0.0
          %1128 = vmatprep.subr.mxu0 0.0
          %1129 = vmatpush1.msra.mxu0 0.0
          %1130 = vmatprep.subr.mxu0 0.0
          %1131 = vmatpush1.msra.mxu0 0.0
          %1132 = vmatprep.subr.mxu0 0.0
          %1133 = vmatpush1.msra.mxu0 0.0
          %1134 = vmatprep.subr.mxu0 0.0
          %1135 = vmatpush1.msra.mxu0 0.0
          %1136 = vmatprep.subr.mxu0 0.0
          %1137 = vmatpush1.msra.mxu0 0.0
          %1138 = vmatprep.subr.mxu0 0.0
          %1139 = vmatpush1.msra.mxu0 0.0
          %1140 = vmatprep.subr.mxu0 0.0
          %1141 = vmatpush1.msra.mxu0 0.0
          %1142 = vmatprep.subr.mxu0 0.0
          %1143 = vmatpush1.msra.mxu0 0.0
          %1144 = vmatprep.subr.mxu0 0.0
          %1145 = vmatpush1.msra.mxu0 0.0
          %1146 = vmatprep.subr.mxu0 0.0
          %1147 = vmatpush1.msra.mxu0 0.0
          %1148 = vmatprep.subr.mxu0 0.0
          %1149 = vmatpush1.msra.mxu0 0.0
          %1150 = vmatprep.subr.mxu0 0.0
          %1151 = vmatpush1.msra.mxu0 0.0
          %1152 = vmatprep.subr.mxu0 0.0
          %1153 = vmatpush1.msra.mxu0 0.0
          %1154 = vmatprep.subr.mxu0 0.0
          %1155 = vmatpush1.msra.mxu0 0.0
          %1156 = vmatprep.subr.mxu0 0.0
          %1157 = vmatpush1.msra.mxu0 0.0
          %1158 = vmatprep.subr.mxu0 0.0
          %1159 = vmatpush1.msra.mxu0 0.0
          %1160 = vmatprep.subr.mxu0 0.0
          %1161 = vmatpush1.msra.mxu0 0.0
          %1162 = vmatprep.subr.mxu0 0.0
          %1163 = vmatpush1.msra.mxu0 0.0
          %1164 = vmatprep.subr.mxu0 0.0
          %1165 = vmatpush1.msra.mxu0 0.0
          %1166 = vmatprep.subr.mxu0 0.0
          %1167 = vmatpush1.msra.mxu0 0.0
          %1168 = vmatprep.subr.mxu0 0.0
          %1169 = vmatpush1.msra.mxu0 0.0
          %1170 = vmatprep.mubr.f32.mxu0 0.0
          %1171 = vmatmul.mubr.f32.gmra.mrb[0].mxu0 %v1104
          %v1172 = vpop.f32.mrb[0].mxu0
          %v1173 = vadd.f32 0.0, %v1172
          %v1174 = vpop.f32.mrb[0].mxu0
          %1175 = vdwg.mxu0
          %v1176 = vmul.f32 %v1173, %v1039
          %v1177 = vsel %vm385, %v1176, 0.0
          %1178 = vadd.xlane.f32.xlu0 %v1177
          %v1179 = vpop.xlane.xlu0 %1178
          %v1180 = vrot.slane %v1179, 4
          %v1181 = vadd.f32 %v1179, %v1180
          %v1182 = vrot.slane %v1181, 2
          %v1183 = vadd.f32 %v1181, %v1182
          %v1184 = vrot.slane %v1183, 1
          %v1185 = vadd.f32 %v1183, %v1184
          %s1186 = vtos %v1185
          %v1187 = vmul.f32 %v1039, %v1039
          %v1188 = vsel %vm385, %v1187, 0.0
          %1189 = vadd.xlane.f32.xlu0 %v1188
          %v1190 = vpop.xlane.xlu0 %1189
          %v1191 = vrot.slane %v1190, 4
          %v1192 = vadd.f32 %v1190, %v1191
          %v1193 = vrot.slane %v1192, 2
          %v1194 = vadd.f32 %v1192, %v1193
          %v1195 = vrot.slane %v1194, 1
          %v1196 = vadd.f32 %v1194, %v1195
          %s1197 = vtos %v1196
          %s1198 = smul.f32 %s1186, 32.0
          %s1199 = ssub.f32 %s1102, %s1198
          %s1200 = smul.f32 %s1197, 256.0
          %s1201 = smul.f32 %s1200, %s1197
          %s1202 = sadd.f32 %s1199, %s1201
          %s1203 = smul.f32 %s1202, 0.0044444446
          %s1204 = sadd.f32 %s1037, %s1203
          %v1205 = vld [vmem:[%s703] sm:$0x1]
          %v1206 = vmul.f32 %v1205, 0.0625
          %v1207 = vld [vmem:[%s714] sm:$0x1]
          %v1208 = vmul.f32 %v1206, 16.0
          %v1209 = vmul.f32 %v1208, %v1206
          %v1210 = vsub.f32 %v1207, %v1209
          %v1211 = vmul.f32 %v1210, 0.06666667
          %v1212 = vmax.f32 %v1211, 0.0
          %v1213 = vadd.f32 %v1212, 0.0001
          %v1214 = vrsqrt.pop %v1213
          %v1215 = vmul.f32 %v1213, %v1214
          %vm1216 = vcmp.eq.f32.partialorder %v1213, inf
          %v1217 = vsel %vm1216, %v1213, %v1215
          %vm1218 = vcmp.eq.f32.partialorder %v1213, 0.0
          %v1219 = vand.u32 %v1213, 2147483648
          %v1220 = vsel %vm1218, %v1219, %v1217
          %v1221 = vsub.f32 1.0, %v1220
          %v1222 = vmax.f32 %v1221, 0.0
          %v1223 = vsel %vm385, %v1222, 0.0
          %1224 = vadd.xlane.f32.xlu0 %v1223
          %v1225 = vpop.xlane.xlu0 %1224
          %v1226 = vrot.slane %v1225, 4
          %v1227 = vadd.f32 %v1225, %v1226
          %v1228 = vrot.slane %v1227, 2
          %v1229 = vadd.f32 %v1227, %v1228
          %v1230 = vrot.slane %v1229, 1
          %v1231 = vadd.f32 %v1229, %v1230
          %s1232 = vtos %v1231
          %s1233 = sadd.f32 %s1066, %s1232
          %v1234 = vmul.f32 %v1211, %v1211
          %v1235 = vsel %vm385, %v1234, 0.0
          %1236 = vadd.xlane.f32.xlu0 %v1235
          %v1237 = vpop.xlane.xlu0 %1236
          %v1238 = vrot.slane %v1237, 4
          %v1239 = vadd.f32 %v1237, %v1238
          %v1240 = vrot.slane %v1239, 2
          %v1241 = vadd.f32 %v1239, %v1240
          %v1242 = vrot.slane %v1241, 1
          %v1243 = vadd.f32 %v1241, %v1242
          %s1244 = vtos %v1243
          %s1245 = sadd.f32 %s1078, %s1244
          %v1246 = vld [vmem:[%s725] sm:$0xff]
          %v1247 = vld [vmem:[%s725 + $0x8] sm:$0xff]
          %v1248 = vld [vmem:[%s725 + $0x10] sm:$0xff]
          %v1249 = vld [vmem:[%s725 + $0x18] sm:$0xff]
          %v1250 = vmul.f32 %v1246, %v1246
          %v1251 = vmul.f32 %v1247, %v1247
          %v1252 = vmul.f32 %v1248, %v1248
          %v1253 = vmul.f32 %v1249, %v1249
          %v1254 = vsel %vm277, %v1250, 0.0
          %v1255 = vsel %vm277, %v1251, 0.0
          %v1256 = vadd.f32 %v1254, %v1255
          %v1257 = vsel %vm277, %v1252, 0.0
          %v1258 = vadd.f32 %v1256, %v1257
          %v1259 = vsel %vm277, %v1253, 0.0
          %v1260 = vadd.f32 %v1258, %v1259
          %1261 = vadd.xlane.f32.xlu0 %v1260
          %v1262 = vpop.xlane.xlu0 %1261
          %v1263 = vrot.slane %v1262, 4
          %v1264 = vadd.f32 %v1262, %v1263
          %v1265 = vrot.slane %v1264, 2
          %v1266 = vadd.f32 %v1264, %v1265
          %v1267 = vrot.slane %v1266, 1
          %v1268 = vadd.f32 %v1266, %v1267
          %s1269 = vtos %v1268
          %v1271 = vsel %vm277, %v1206, 0
          %1273 = vmatprep.subr.mxu0 0.0
          %1274 = vmatpush1.msra.mxu0 %v1246
          %1275 = vmatprep.subr.mxu0 0.0
          %1276 = vmatpush1.msra.mxu0 %v1247
          %1277 = vmatprep.subr.mxu0 0.0
          %1278 = vmatpush1.msra.mxu0 %v1248
          %1279 = vmatprep.subr.mxu0 0.0
          %1280 = vmatpush1.msra.mxu0 %v1249
          %1281 = vmatprep.subr.mxu0 0.0
          %1282 = vmatpush1.msra.mxu0 0.0
          %1283 = vmatprep.subr.mxu0 0.0
          %1284 = vmatpush1.msra.mxu0 0.0
          %1285 = vmatprep.subr.mxu0 0.0
          %1286 = vmatpush1.msra.mxu0 0.0
          %1287 = vmatprep.subr.mxu0 0.0
          %1288 = vmatpush1.msra.mxu0 0.0
          %1289 = vmatprep.subr.mxu0 0.0
          %1290 = vmatpush1.msra.mxu0 0.0
          %1291 = vmatprep.subr.mxu0 0.0
          %1292 = vmatpush1.msra.mxu0 0.0
          %1293 = vmatprep.subr.mxu0 0.0
          %1294 = vmatpush1.msra.mxu0 0.0
          %1295 = vmatprep.subr.mxu0 0.0
          %1296 = vmatpush1.msra.mxu0 0.0
          %1297 = vmatprep.subr.mxu0 0.0
          %1298 = vmatpush1.msra.mxu0 0.0
          %1299 = vmatprep.subr.mxu0 0.0
          %1300 = vmatpush1.msra.mxu0 0.0
          %1301 = vmatprep.subr.mxu0 0.0
          %1302 = vmatpush1.msra.mxu0 0.0
          %1303 = vmatprep.subr.mxu0 0.0
          %1304 = vmatpush1.msra.mxu0 0.0
          %1305 = vmatprep.subr.mxu0 0.0
          %1306 = vmatpush1.msra.mxu0 0.0
          %1307 = vmatprep.subr.mxu0 0.0
          %1308 = vmatpush1.msra.mxu0 0.0
          %1309 = vmatprep.subr.mxu0 0.0
          %1310 = vmatpush1.msra.mxu0 0.0
          %1311 = vmatprep.subr.mxu0 0.0
          %1312 = vmatpush1.msra.mxu0 0.0
          %1313 = vmatprep.subr.mxu0 0.0
          %1314 = vmatpush1.msra.mxu0 0.0
          %1315 = vmatprep.subr.mxu0 0.0
          %1316 = vmatpush1.msra.mxu0 0.0
          %1317 = vmatprep.subr.mxu0 0.0
          %1318 = vmatpush1.msra.mxu0 0.0
          %1319 = vmatprep.subr.mxu0 0.0
          %1320 = vmatpush1.msra.mxu0 0.0
          %1321 = vmatprep.subr.mxu0 0.0
          %1322 = vmatpush1.msra.mxu0 0.0
          %1323 = vmatprep.subr.mxu0 0.0
          %1324 = vmatpush1.msra.mxu0 0.0
          %1325 = vmatprep.subr.mxu0 0.0
          %1326 = vmatpush1.msra.mxu0 0.0
          %1327 = vmatprep.subr.mxu0 0.0
          %1328 = vmatpush1.msra.mxu0 0.0
          %1329 = vmatprep.subr.mxu0 0.0
          %1330 = vmatpush1.msra.mxu0 0.0
          %1331 = vmatprep.subr.mxu0 0.0
          %1332 = vmatpush1.msra.mxu0 0.0
          %1333 = vmatprep.subr.mxu0 0.0
          %1334 = vmatpush1.msra.mxu0 0.0
          %1335 = vmatprep.subr.mxu0 0.0
          %1336 = vmatpush1.msra.mxu0 0.0
          %1337 = vmatprep.mubr.f32.mxu0 0.0
          %1338 = vmatmul.mubr.f32.gmra.mrb[0].mxu0 %v1271
          %v1339 = vpop.f32.mrb[0].mxu0
          %v1340 = vadd.f32 0.0, %v1339
          %v1341 = vpop.f32.mrb[0].mxu0
          %1342 = vdwg.mxu0
          %v1343 = vmul.f32 %v1340, %v1206
          %v1344 = vsel %vm385, %v1343, 0.0
          %1345 = vadd.xlane.f32.xlu0 %v1344
          %v1346 = vpop.xlane.xlu0 %1345
          %v1347 = vrot.slane %v1346, 4
          %v1348 = vadd.f32 %v1346, %v1347
          %v1349 = vrot.slane %v1348, 2
          %v1350 = vadd.f32 %v1348, %v1349
          %v1351 = vrot.slane %v1350, 1
          %v1352 = vadd.f32 %v1350, %v1351
          %s1353 = vtos %v1352
          %v1354 = vmul.f32 %v1206, %v1206
          %v1355 = vsel %vm385, %v1354, 0.0
          %1356 = vadd.xlane.f32.xlu0 %v1355
          %v1357 = vpop.xlane.xlu0 %1356
          %v1358 = vrot.slane %v1357, 4
          %v1359 = vadd.f32 %v1357, %v1358
          %v1360 = vrot.slane %v1359, 2
          %v1361 = vadd.f32 %v1359, %v1360
          %v1362 = vrot.slane %v1361, 1
          %v1363 = vadd.f32 %v1361, %v1362
          %s1364 = vtos %v1363
          %s1365 = smul.f32 %s1353, 32.0
          %s1366 = ssub.f32 %s1269, %s1365
          %s1367 = smul.f32 %s1364, 256.0
          %s1368 = smul.f32 %s1367, %s1364
          %s1369 = sadd.f32 %s1366, %s1368
          %s1370 = smul.f32 %s1369, 0.0044444446
          %s1371 = sadd.f32 %s1204, %s1370
          %s1372 = smul.f32 %s1233, 0.010416667
          %s1373 = ssub.f32 %s1371, %s1245
          %s1374 = smul.f32 %s1373, 0.010416667
          %v1375 = vld [vmem:[#allocation5] sm:$0x1]
          %v1376 = vmul.f32 %v1375, 0.0625
          %v1377 = vmul.f32 %v1376, 20.0
          %s1378 = smul.f32 %s1374, 5.0
          %v1379 = vstv %s1378
          %v1380 = vadd.f32 %v1377, %v1379
          %v1381 = vstv %s1372
          %v1382 = vadd.f32 %v1380, %v1381
          %1383 = vst.msk [vmem:[#allocation12] sm:$0x1] %vm374, %v1382
        $region52: #{m2fnet_audio_embedding_loss.1} parent=31 // pred_fallthru
          _
        // Predicated region
        $region53: #{m2fnet_audio_embedding_loss.1} parent=31 // pred_check
          %p1384 = pneg %p112
        $region54: #{m2fnet_audio_embedding_loss.1} parent=31 // pred_check_branch
          %1386 = sbr.rel (%p1384) target = $region56
        $region55: #{m2fnet_audio_embedding_loss.1} parent=31 // pred_region
          %s1388 = ssub.s32 16, 16
          %1389 = vsyncadd [#allocation8], %s1388
          %s1391 = sshll.u32 [#allocation12], 4
          %s1392 = int_to_ptr.vmem [resolvable:$true] %s1391
          %1394 = dma.vmem_to_hbm [thread:$0]  %s1392, 16, %s3, [#allocation8]
        $region56: #{m2fnet_audio_embedding_loss.1} parent=31 // pred_fallthru
          _
        // Predicated region
        $region57: #{m2fnet_audio_embedding_loss.1} parent=31 // pred_check
          %p1395 = pneg %p112
        $region58: #{m2fnet_audio_embedding_loss.1} parent=31 // pred_check_branch
          %1397 = sbr.rel (%p1395) target = $region60
        $region59: #{m2fnet_audio_embedding_loss.1} parent=31 // pred_region
          %1398 = dma.done [#allocation8], 16
        $region60: #{m2fnet_audio_embedding_loss.1} parent=31 // pred_fallthru
          _
      $region32: #{m2fnet_audio_embedding_loss.1} parent=5 // pred_fallthru
        _
      %p1399 = scmp.le.s32.totalorder 2, %s16
      // Predicated region
      $region61: #{m2fnet_audio_embedding_loss.1} parent=5 // pred_check
        %p1400 = pneg %p1399
      $region62: #{m2fnet_audio_embedding_loss.1} parent=5 // pred_check_branch
        %1402 = sbr.rel (%p1400) target = $region64
      $region63: #{m2fnet_audio_embedding_loss.1} parent=5 // pred_region
        %s1403 = ssub.s32 %s16, 2
      $region64: #{m2fnet_audio_embedding_loss.1} parent=5 // pred_fallthru
        _
    $region6: #{m2fnet_audio_embedding_loss.1} parent=1 // loop_footer
      %s20 = sadd.s32 1, %s16
    $region7: #{m2fnet_audio_embedding_loss.1} parent=1 // loop_footer_branch
      %15 = sbr.rel target = $region3
    $region8: #{m2fnet_audio_embedding_loss.1} parent=1 // loop_exit
      _
    %1404 = vsyncpa [#allocation7], 1
    %s1405 = scalar_lea.sflag [#allocation7], 1
    %1406 = vsyncpa %s1405, 1
    %1407 = vsyncpa [#allocation10], 1
    %s1408 = scalar_lea.sflag [#allocation10], 1
    %1409 = vsyncpa %s1408, 1
    %1410 = vsyncpa [#allocation8], 1
    %s1411 = scalar_lea.sflag [#allocation8], 1
    %1412 = vsyncpa %s1411, 1

</llo_original>
